<compile_context>
chip_gen: v6e
topology: v6e:2x2x1
jax: 0.10.0
libtpu: 0.0.40
codegen_flags: <defaults>
</compile_context>

<pallas_src>
import functools

import jax
import jax.numpy as jnp
from jax.experimental import pallas as pl
from jax.experimental.pallas import tpu as pltpu

EPS = 1e-5


def _round_up(n, m):
    return ((n + m - 1) // m) * m


# ----------------------------------------------------------------------------
# Kernel 1: fused conv (single K=9*Cin matmul) + ReLU + spatial mean pooling
# ----------------------------------------------------------------------------
def conv_pool_kernel(x_ref, w_ref, b_ref, pool_ref, out_ref):
    # x_ref:    [Bt*M, K9]   bf16  im2col rows for Bt samples (M = H*W, K9 = 9*Cin)
    # w_ref:    [K9, F_pad]  bf16  conv weight (resident)
    # b_ref:    [1, F_pad]   f32   conv bias   (resident)
    # pool_ref: [Bt, Bt*M]   f32   block-diagonal 1/(H*W) pooling matrix (resident)
    # out_ref:  [Bt, F_pad]  f32   pooled features for this batch tile
    feat = jnp.dot(x_ref[...], w_ref[...], preferred_element_type=jnp.float32)
    feat = jnp.maximum(feat + b_ref[...], 0.0)
    # adaptive_avg_pool2d((1,1)) as one MXU matmul (per-sample spatial mean).
    out_ref[...] = jnp.dot(pool_ref[...], feat, preferred_element_type=jnp.float32)


# ----------------------------------------------------------------------------
# Kernel 2: Sender + Receiver heads (cross-batch BatchNorm -> needs full batch)
# ----------------------------------------------------------------------------
def heads_kernel(pooled_ref, sp_g_ref, sp_b_ref, sp_w_ref,
                 rc_w1_ref, rc_b1_ref, rc_g_ref, rc_bt_ref, rc_w2_ref,
                 h_ref, z_ref, *, B_real):
    inv_b = 1.0 / B_real
    B_pad = pooled_ref.shape[0]
    rmask = (jax.lax.broadcasted_iota(jnp.int32, (B_pad, 1), 0) < B_real
             ).astype(jnp.float32)
    pooled = pooled_ref[...] * rmask              # zero out padded-batch rows

    # Sender: BatchNorm1d (training batch stats, biased var) -> ReLU -> Linear
    mu = jnp.sum(pooled, axis=0, keepdims=True) * inv_b
    d = (pooled - mu) * rmask
    var = jnp.sum(d * d, axis=0, keepdims=True) * inv_b
    s = jnp.maximum(d * jax.lax.rsqrt(var + EPS) * sp_g_ref[...] + sp_b_ref[...],
                    0.0) * rmask
    h = jnp.dot(s.astype(jnp.bfloat16), sp_w_ref[...],
                preferred_element_type=jnp.float32)
    h_ref[...] = h

    # Receiver: Linear -> BatchNorm1d -> ReLU -> Linear(no bias)
    a = (jnp.dot(h.astype(jnp.bfloat16), rc_w1_ref[...],
                 preferred_element_type=jnp.float32) + rc_b1_ref[...]) * rmask
    mu2 = jnp.sum(a, axis=0, keepdims=True) * inv_b
    d2 = (a - mu2) * rmask
    var2 = jnp.sum(d2 * d2, axis=0, keepdims=True) * inv_b
    r = jnp.maximum(d2 * jax.lax.rsqrt(var2 + EPS) * rc_g_ref[...] + rc_bt_ref[...],
                    0.0) * rmask
    z_ref[...] = jnp.dot(r.astype(jnp.bfloat16), rc_w2_ref[...],
                         preferred_element_type=jnp.float32)


# ----------------------------------------------------------------------------
# Wrapper: layout prep (im2col / pad / bf16 cast) + the two pallas_calls
# ----------------------------------------------------------------------------
def simclr_forward(x, params):
    B, Cin, H, W = x.shape
    feat_dim = params["conv_w"].shape[0]
    h_dim = params["sp_w"].shape[0]
    z_dim = params["rc_w2"].shape[0]

    M = H * W
    K9 = Cin * 9
    F_pad = _round_up(feat_dim, 128)
    Hd_pad = _round_up(h_dim, 128)
    Zd_pad = _round_up(z_dim, 128)

    # Batch tiling: Bt samples per grid step.
    bt = B if B <= 8 else 8
    B_pad = _round_up(B, bt)
    G = B_pad // bt

    # --- im2col in the wrapper (small Cin => tiny HBM blow-up), bf16 ----------
    xb = jnp.pad(x, ((0, B_pad - B), (0, 0), (0, 0), (0, 0)))
    xp = jnp.pad(xb, ((0, 0), (0, 0), (1, 1), (1, 1)))              # spatial pad=1
    cols = [xp[:, :, dy:dy + H, dx:dx + W] for dy in range(3) for dx in range(3)]
    p = jnp.stack(cols, axis=-1)                                    # [Bp,Cin,H,W,9]
    p = p.transpose(0, 2, 3, 1, 4).reshape(B_pad * M, K9)           # k = c*9 + tap
    x_cols = p.astype(jnp.bfloat16)

    # conv weight [F, Cin, 3, 3] -> [K9, F_pad] bf16 (same k ordering), bias f32
    wmat = params["conv_w"].reshape(feat_dim, K9).T
    wmat = jnp.pad(wmat, ((0, 0), (0, F_pad - feat_dim))).astype(jnp.bfloat16)
    convb = jnp.pad(params["conv_b"], (0, F_pad - feat_dim)).reshape(1, F_pad)

    # block-diagonal pooling matrix: P[i, j] = 1/(H*W) if j // M == i
    pool_mat = jnp.repeat(jnp.eye(bt, dtype=jnp.float32) / M, M, axis=1)

    conv_flops = 2 * B_pad * M * K9 * F_pad + 2 * B_pad * M * F_pad
    conv_bytes = int(x_cols.size * 2 + wmat.size * 2
                     + 4 * (convb.size + pool_mat.size + B_pad * F_pad))

    pooled = pl.pallas_call(
        conv_pool_kernel,
        out_shape=jax.ShapeDtypeStruct((B_pad, F_pad), jnp.float32),
        grid=(G,),
        in_specs=[
            pl.BlockSpec((bt * M, K9), lambda g: (g, 0)),    # per-tile activations
            pl.BlockSpec((K9, F_pad), lambda g: (0, 0)),     # resident conv weight
            pl.BlockSpec((1, F_pad), lambda g: (0, 0)),      # resident conv bias
            pl.BlockSpec((bt, bt * M), lambda g: (0, 0)),    # resident pool matrix
        ],
        out_specs=pl.BlockSpec((bt, F_pad), lambda g: (g, 0)),
        compiler_params=pltpu.CompilerParams(
            dimension_semantics=("parallel",),               # shards TCs on v7x
            vmem_limit_bytes=64 * 1024 * 1024),
        cost_estimate=pl.CostEstimate(
            flops=conv_flops, transcendentals=0, bytes_accessed=conv_bytes),
    )(x_cols, wmat, convb, pool_mat)

    # --- head parameters (lane-padded; head matmul weights in bf16) -----------
    def pad1(v, n):
        return jnp.pad(v, (0, n - v.shape[0])).reshape(1, n)

    def pad2(m, r, c):
        return jnp.pad(m, ((0, r - m.shape[0]), (0, c - m.shape[1])))

    sp_g = pad1(params["sp_gamma"], F_pad)
    sp_b = pad1(params["sp_beta"], F_pad)
    sp_w = pad2(params["sp_w"].T, F_pad, Hd_pad).astype(jnp.bfloat16)     # [in,out]
    rc_w1 = pad2(params["rc_w1"].T, Hd_pad, Hd_pad).astype(jnp.bfloat16)
    rc_b1 = pad1(params["rc_b1"], Hd_pad)
    rc_g = pad1(params["rc_gamma"], Hd_pad)
    rc_bt = pad1(params["rc_beta"], Hd_pad)
    rc_w2 = pad2(params["rc_w2"].T, Hd_pad, Zd_pad).astype(jnp.bfloat16)

    h_pad, z_pad = pl.pallas_call(
        functools.partial(heads_kernel, B_real=B),
        out_shape=(jax.ShapeDtypeStruct((B_pad, Hd_pad), jnp.float32),
                   jax.ShapeDtypeStruct((B_pad, Zd_pad), jnp.float32)),
    )(pooled, sp_g, sp_b, sp_w, rc_w1, rc_b1, rc_g, rc_bt, rc_w2)

    return h_pad[:B, :h_dim], z_pad[:B, :z_dim]


# ----------------------------------------------------------------------------
# Pure-JAX reference (same math; matmul operands in bf16 to match the kernels)
# ----------------------------------------------------------------------------
def simclr_reference(x, params):
    B, Cin, H, W = x.shape
    feat_dim = params["conv_w"].shape[0]

    xp = jnp.pad(x, ((0, 0), (0, 0), (1, 1), (1, 1)))
    cols = [xp[:, :, dy:dy + H, dx:dx + W] for dy in range(3) for dx in range(3)]
    p = jnp.stack(cols, axis=-1)                         # [B, Cin, H, W, 9]
    p = p.transpose(0, 2, 3, 1, 4).reshape(B, H * W, Cin * 9)
    wmat = params["conv_w"].reshape(feat_dim, Cin * 9)
    feat = jnp.dot(p.astype(jnp.bfloat16), wmat.T.astype(jnp.bfloat16),
                   preferred_element_type=jnp.float32)
    feat = jnp.maximum(feat + params["conv_b"], 0.0)
    pooled = feat.mean(axis=1)                           # adaptive_avg_pool2d((1,1))

    def bn(v, gamma, beta):
        mu = v.mean(0, keepdims=True)
        var = ((v - mu) ** 2).mean(0, keepdims=True)     # biased (training) variance
        return (v - mu) * jax.lax.rsqrt(var + EPS) * gamma + beta

    s = jnp.maximum(bn(pooled, params["sp_gamma"], params["sp_beta"]), 0.0)
    h = jnp.dot(s.astype(jnp.bfloat16), params["sp_w"].T.astype(jnp.bfloat16),
                preferred_element_type=jnp.float32)
    a = jnp.dot(h.astype(jnp.bfloat16), params["rc_w1"].T.astype(jnp.bfloat16),
                preferred_element_type=jnp.float32) + params["rc_b1"]
    r = jnp.maximum(bn(a, params["rc_gamma"], params["rc_beta"]), 0.0)
    z = jnp.dot(r.astype(jnp.bfloat16), params["rc_w2"].T.astype(jnp.bfloat16),
                preferred_element_type=jnp.float32)
    return h, z


# ----------------------------------------------------------------------------
# Deterministic parameter init (PyTorch-layout weights)
# ----------------------------------------------------------------------------
def init_params(key, cin, feat_dim, h_dim, z_dim):
    ks = jax.random.split(key, 6)
    return {
        "conv_w": jax.random.normal(ks[0], (feat_dim, cin, 3, 3), jnp.float32) * 0.1,
        "conv_b": jax.random.normal(ks[1], (feat_dim,), jnp.float32) * 0.01,
        # Sender: BatchNorm1d(feat_dim) -> ReLU -> Linear(feat_dim, h_dim, bias=False)
        "sp_gamma": jnp.ones((feat_dim,), jnp.float32),
        "sp_beta": jnp.zeros((feat_dim,), jnp.float32),
        "sp_w": jax.random.normal(ks[2], (h_dim, feat_dim), jnp.float32) * 0.1,
        # Receiver: Linear(h,h) -> BatchNorm1d(h) -> ReLU -> Linear(h, z, bias=False)
        "rc_w1": jax.random.normal(ks[3], (h_dim, h_dim), jnp.float32) * 0.1,
        "rc_b1": jax.random.normal(ks[4], (h_dim,), jnp.float32) * 0.01,
        "rc_gamma": jnp.ones((h_dim,), jnp.float32),
        "rc_beta": jnp.zeros((h_dim,), jnp.float32),
        "rc_w2": jax.random.normal(ks[5], (z_dim, h_dim), jnp.float32) * 0.1,
    }


if __name__ == "__main__":
    key = jax.random.PRNGKey(0)
    k_x, k_p = jax.random.split(key)

    B, Cin, H, W = 2, 4, 16, 16                 # NCHW input, as in PyTorch
    feat_dim, h_dim, z_dim = 64, 32, 16

    x = jax.random.normal(k_x, (B, Cin, H, W), jnp.float32)
    params = init_params(k_p, Cin, feat_dim, h_dim, z_dim)

    fwd = jax.jit(simclr_forward)
    h, z = fwd(x, params)
    h = jax.block_until_ready(h)
    z = jax.block_until_ready(z)

    h_ref, z_ref = simclr_reference(x, params)
    assert h.shape == (B, h_dim) and z.shape == (B, z_dim)
    assert jnp.allclose(h, h_ref, atol=5e-3, rtol=5e-3), float(jnp.max(jnp.abs(h - h_ref)))
    assert jnp.allclose(z, z_ref, atol=5e-3, rtol=5e-3), float(jnp.max(jnp.abs(z - z_ref)))

    print("KERNEL_OK")
</pallas_src>

<mosaic_0001>
module attributes {stable_mosaic.version = 11 : i64} {
  func.func @conv_pool_kernel(%arg0: i32, %arg1: memref<512x36xbf16, #tpu.memory_space<vmem>>, %arg2: memref<36x128xbf16, #tpu.memory_space<vmem>>, %arg3: memref<1x128xf32, #tpu.memory_space<vmem>>, %arg4: memref<2x512xf32, #tpu.memory_space<vmem>>, %arg5: memref<2x128xf32, #tpu.memory_space<vmem>>) attributes {dimension_semantics = [#tpu.dimension_semantics<parallel>], iteration_bounds = array<i64: 1>, scalar_prefetch = 0 : i64, scratch_operands = 0 : i64, tpu.core_type = #tpu.core_type<tc>, window_params = [{transform_indices = @transform_0, window_bounds = array<i64: 512, 36>}, {pipeline_mode = #tpu.pipeline_mode<synchronous>, transform_indices = @transform_1, window_bounds = array<i64: 36, 128>}, {pipeline_mode = #tpu.pipeline_mode<synchronous>, transform_indices = @transform_2, window_bounds = array<i64: 1, 128>}, {pipeline_mode = #tpu.pipeline_mode<synchronous>, transform_indices = @transform_3, window_bounds = array<i64: 2, 512>}, {transform_indices = @transform_4, window_bounds = array<i64: 2, 128>}]} {
    %c0 = arith.constant 0 : index
    %c0_0 = arith.constant 0 : index
    %0 = vector.load %arg1[%c0, %c0_0] : memref<512x36xbf16, #tpu.memory_space<vmem>>, vector<512x36xbf16>
    %c0_1 = arith.constant 0 : index
    %c0_2 = arith.constant 0 : index
    %1 = vector.load %arg2[%c0_1, %c0_2] : memref<36x128xbf16, #tpu.memory_space<vmem>>, vector<36x128xbf16>
    %cst = arith.constant dense<0.000000e+00> : vector<512x128xf32>
    %2 = tpu.matmul %0, %1, %cst {dimension_numbers = #tpu.dot_dimension_numbers<[1], [0], [0], [1], [0, 0, 1, 1], [], []>} : vector<512x36xbf16>, vector<36x128xbf16>, vector<512x128xf32> -> vector<512x128xf32>
    %c0_3 = arith.constant 0 : index
    %c0_4 = arith.constant 0 : index
    %3 = vector.load %arg3[%c0_3, %c0_4] : memref<1x128xf32, #tpu.memory_space<vmem>>, vector<1x128xf32>
    %4 = vector.broadcast %3 : vector<1x128xf32> to vector<512x128xf32>
    %5 = arith.addf %2, %4 : vector<512x128xf32>
    %cst_5 = arith.constant 0.000000e+00 : f32
    %6 = vector.broadcast %cst_5 : f32 to vector<512x128xf32>
    %7 = arith.maximumf %5, %6 : vector<512x128xf32>
    %c0_6 = arith.constant 0 : index
    %c0_7 = arith.constant 0 : index
    %8 = vector.load %arg4[%c0_6, %c0_7] : memref<2x512xf32, #tpu.memory_space<vmem>>, vector<2x512xf32>
    %cst_8 = arith.constant dense<0.000000e+00> : vector<2x128xf32>
    %9 = tpu.matmul %8, %7, %cst_8 {dimension_numbers = #tpu.dot_dimension_numbers<[1], [0], [0], [1], [0, 0, 1, 1], [], []>} : vector<2x512xf32>, vector<512x128xf32>, vector<2x128xf32> -> vector<2x128xf32>
    %c0_9 = arith.constant 0 : index
    %c0_10 = arith.constant 0 : index
    %10 = vector.load %arg5[%c0_9, %c0_10] : memref<2x128xf32, #tpu.memory_space<vmem>>, vector<2x128xf32>
    tpu.vector_store %arg5[%c0_9, %c0_10], %9 {strides = array<i32>} : memref<2x128xf32, #tpu.memory_space<vmem>>, vector<2x128xf32>,
    return
  }
  func.func @transform_0(%arg0: i32) -> (i32, i32) {
    %c0_i32 = arith.constant 0 : i32
    %c0_i32_0 = arith.constant 0 : i32
    return %arg0, %c0_i32 : i32, i32
  }
  func.func @transform_1(%arg0: i32) -> (i32, i32) {
    %c0_i32 = arith.constant 0 : i32
    %c0_i32_0 = arith.constant 0 : i32
    %c0_i32_1 = arith.constant 0 : i32
    return %c0_i32, %c0_i32_0 : i32, i32
  }
  func.func @transform_2(%arg0: i32) -> (i32, i32) {
    %c0_i32 = arith.constant 0 : i32
    %c0_i32_0 = arith.constant 0 : i32
    %c0_i32_1 = arith.constant 0 : i32
    return %c0_i32, %c0_i32_0 : i32, i32
  }
  func.func @transform_3(%arg0: i32) -> (i32, i32) {
    %c0_i32 = arith.constant 0 : i32
    %c0_i32_0 = arith.constant 0 : i32
    %c0_i32_1 = arith.constant 0 : i32
    return %c0_i32, %c0_i32_0 : i32, i32
  }
  func.func @transform_4(%arg0: i32) -> (i32, i32) {
    %c0_i32 = arith.constant 0 : i32
    %c0_i32_0 = arith.constant 0 : i32
    return %arg0, %c0_i32 : i32, i32
  }
}

module attributes {stable_mosaic.version = 11 : i64} {
  func.func @heads_kernel(%arg0: memref<2x128xf32, #tpu.memory_space<vmem>>, %arg1: memref<1x128xf32, #tpu.memory_space<vmem>>, %arg2: memref<1x128xf32, #tpu.memory_space<vmem>>, %arg3: memref<128x128xbf16, #tpu.memory_space<vmem>>, %arg4: memref<128x128xbf16, #tpu.memory_space<vmem>>, %arg5: memref<1x128xf32, #tpu.memory_space<vmem>>, %arg6: memref<1x128xf32, #tpu.memory_space<vmem>>, %arg7: memref<1x128xf32, #tpu.memory_space<vmem>>, %arg8: memref<128x128xbf16, #tpu.memory_space<vmem>>, %arg9: memref<2x128xf32, #tpu.memory_space<vmem>>, %arg10: memref<2x128xf32, #tpu.memory_space<vmem>>) attributes {dimension_semantics = [], scalar_prefetch = 0 : i64, scratch_operands = 0 : i64, tpu.core_type = #tpu.core_type<tc>} {
    %0 = tpu.iota {dimensions = array<i32: 0>} : vector<2x1xi32>
    %c2_i32 = arith.constant 2 : i32
    %1 = vector.broadcast %c2_i32 : i32 to vector<2x1xi32>
    %2 = arith.cmpi slt, %0, %1 : vector<2x1xi32>
    %3 = arith.extui %2 : vector<2x1xi1> to vector<2x1xi32>
    %4 = arith.sitofp %3 : vector<2x1xi32> to vector<2x1xf32>
    %c0 = arith.constant 0 : index
    %c0_0 = arith.constant 0 : index
    %5 = vector.load %arg0[%c0, %c0_0] : memref<2x128xf32, #tpu.memory_space<vmem>>, vector<2x128xf32>
    %6 = vector.broadcast %4 : vector<2x1xf32> to vector<2x128xf32>
    %7 = arith.mulf %5, %6 : vector<2x128xf32>
    %cst = arith.constant dense<0.000000e+00> : vector<128xf32>
    %8 = vector.multi_reduction <add>, %7, %cst [0] : vector<2x128xf32> to vector<128xf32>
    %9 = vector.shape_cast %8 : vector<128xf32> to vector<1x128xf32>
    %cst_1 = arith.constant 5.000000e-01 : f32
    %10 = vector.broadcast %cst_1 : f32 to vector<1x128xf32>
    %11 = arith.mulf %9, %10 : vector<1x128xf32>
    %12 = vector.broadcast %11 : vector<1x128xf32> to vector<2x128xf32>
    %13 = arith.subf %7, %12 : vector<2x128xf32>
    %14 = vector.broadcast %4 : vector<2x1xf32> to vector<2x128xf32>
    %15 = arith.mulf %13, %14 : vector<2x128xf32>
    %16 = arith.mulf %15, %15 : vector<2x128xf32>
    %cst_2 = arith.constant dense<0.000000e+00> : vector<128xf32>
    %17 = vector.multi_reduction <add>, %16, %cst_2 [0] : vector<2x128xf32> to vector<128xf32>
    %18 = vector.shape_cast %17 : vector<128xf32> to vector<1x128xf32>
    %cst_3 = arith.constant 5.000000e-01 : f32
    %19 = vector.broadcast %cst_3 : f32 to vector<1x128xf32>
    %20 = arith.mulf %18, %19 : vector<1x128xf32>
    %cst_4 = arith.constant 9.99999974E-6 : f32
    %21 = vector.broadcast %cst_4 : f32 to vector<1x128xf32>
    %22 = arith.addf %20, %21 : vector<1x128xf32>
    %23 = math.rsqrt %22 : vector<1x128xf32>
    %24 = vector.broadcast %23 : vector<1x128xf32> to vector<2x128xf32>
    %25 = arith.mulf %15, %24 : vector<2x128xf32>
    %c0_5 = arith.constant 0 : index
    %c0_6 = arith.constant 0 : index
    %26 = vector.load %arg1[%c0_5, %c0_6] : memref<1x128xf32, #tpu.memory_space<vmem>>, vector<1x128xf32>
    %27 = vector.broadcast %26 : vector<1x128xf32> to vector<2x128xf32>
    %28 = arith.mulf %25, %27 : vector<2x128xf32>
    %c0_7 = arith.constant 0 : index
    %c0_8 = arith.constant 0 : index
    %29 = vector.load %arg2[%c0_7, %c0_8] : memref<1x128xf32, #tpu.memory_space<vmem>>, vector<1x128xf32>
    %30 = vector.broadcast %29 : vector<1x128xf32> to vector<2x128xf32>
    %31 = arith.addf %28, %30 : vector<2x128xf32>
    %cst_9 = arith.constant 0.000000e+00 : f32
    %32 = vector.broadcast %cst_9 : f32 to vector<2x128xf32>
    %33 = arith.maximumf %31, %32 : vector<2x128xf32>
    %34 = vector.broadcast %4 : vector<2x1xf32> to vector<2x128xf32>
    %35 = arith.mulf %33, %34 : vector<2x128xf32>
    %36 = arith.truncf %35 : vector<2x128xf32> to vector<2x128xbf16>
    %c0_10 = arith.constant 0 : index
    %c0_11 = arith.constant 0 : index
    %37 = vector.load %arg3[%c0_10, %c0_11] : memref<128x128xbf16, #tpu.memory_space<vmem>>, vector<128x128xbf16>
    %cst_12 = arith.constant dense<0.000000e+00> : vector<2x128xf32>
    %38 = tpu.matmul %36, %37, %cst_12 {dimension_numbers = #tpu.dot_dimension_numbers<[1], [0], [0], [1], [0, 0, 1, 1], [], []>} : vector<2x128xbf16>, vector<128x128xbf16>, vector<2x128xf32> -> vector<2x128xf32>
    %c0_13 = arith.constant 0 : index
    %c0_14 = arith.constant 0 : index
    %39 = vector.load %arg9[%c0_13, %c0_14] : memref<2x128xf32, #tpu.memory_space<vmem>>, vector<2x128xf32>
    tpu.vector_store %arg9[%c0_13, %c0_14], %38 {strides = array<i32>} : memref<2x128xf32, #tpu.memory_space<vmem>>, vector<2x128xf32>,
    %40 = arith.truncf %38 : vector<2x128xf32> to vector<2x128xbf16>
    %c0_15 = arith.constant 0 : index
    %c0_16 = arith.constant 0 : index
    %41 = vector.load %arg4[%c0_15, %c0_16] : memref<128x128xbf16, #tpu.memory_space<vmem>>, vector<128x128xbf16>
    %cst_17 = arith.constant dense<0.000000e+00> : vector<2x128xf32>
    %42 = tpu.matmul %40, %41, %cst_17 {dimension_numbers = #tpu.dot_dimension_numbers<[1], [0], [0], [1], [0, 0, 1, 1], [], []>} : vector<2x128xbf16>, vector<128x128xbf16>, vector<2x128xf32> -> vector<2x128xf32>
    %c0_18 = arith.constant 0 : index
    %c0_19 = arith.constant 0 : index
    %43 = vector.load %arg5[%c0_18, %c0_19] : memref<1x128xf32, #tpu.memory_space<vmem>>, vector<1x128xf32>
    %44 = vector.broadcast %43 : vector<1x128xf32> to vector<2x128xf32>
    %45 = arith.addf %42, %44 : vector<2x128xf32>
    %46 = vector.broadcast %4 : vector<2x1xf32> to vector<2x128xf32>
    %47 = arith.mulf %45, %46 : vector<2x128xf32>
    %cst_20 = arith.constant dense<0.000000e+00> : vector<128xf32>
    %48 = vector.multi_reduction <add>, %47, %cst_20 [0] : vector<2x128xf32> to vector<128xf32>
    %49 = vector.shape_cast %48 : vector<128xf32> to vector<1x128xf32>
    %cst_21 = arith.constant 5.000000e-01 : f32
    %50 = vector.broadcast %cst_21 : f32 to vector<1x128xf32>
    %51 = arith.mulf %49, %50 : vector<1x128xf32>
    %52 = vector.broadcast %51 : vector<1x128xf32> to vector<2x128xf32>
    %53 = arith.subf %47, %52 : vector<2x128xf32>
    %54 = vector.broadcast %4 : vector<2x1xf32> to vector<2x128xf32>
    %55 = arith.mulf %53, %54 : vector<2x128xf32>
    %56 = arith.mulf %55, %55 : vector<2x128xf32>
    %cst_22 = arith.constant dense<0.000000e+00> : vector<128xf32>
    %57 = vector.multi_reduction <add>, %56, %cst_22 [0] : vector<2x128xf32> to vector<128xf32>
    %58 = vector.shape_cast %57 : vector<128xf32> to vector<1x128xf32>
    %cst_23 = arith.constant 5.000000e-01 : f32
    %59 = vector.broadcast %cst_23 : f32 to vector<1x128xf32>
    %60 = arith.mulf %58, %59 : vector<1x128xf32>
    %cst_24 = arith.constant 9.99999974E-6 : f32
    %61 = vector.broadcast %cst_24 : f32 to vector<1x128xf32>
    %62 = arith.addf %60, %61 : vector<1x128xf32>
    %63 = math.rsqrt %62 : vector<1x128xf32>
    %64 = vector.broadcast %63 : vector<1x128xf32> to vector<2x128xf32>
    %65 = arith.mulf %55, %64 : vector<2x128xf32>
    %c0_25 = arith.constant 0 : index
    %c0_26 = arith.constant 0 : index
    %66 = vector.load %arg6[%c0_25, %c0_26] : memref<1x128xf32, #tpu.memory_space<vmem>>, vector<1x128xf32>
    %67 = vector.broadcast %66 : vector<1x128xf32> to vector<2x128xf32>
    %68 = arith.mulf %65, %67 : vector<2x128xf32>
    %c0_27 = arith.constant 0 : index
    %c0_28 = arith.constant 0 : index
    %69 = vector.load %arg7[%c0_27, %c0_28] : memref<1x128xf32, #tpu.memory_space<vmem>>, vector<1x128xf32>
    %70 = vector.broadcast %69 : vector<1x128xf32> to vector<2x128xf32>
    %71 = arith.addf %68, %70 : vector<2x128xf32>
    %cst_29 = arith.constant 0.000000e+00 : f32
    %72 = vector.broadcast %cst_29 : f32 to vector<2x128xf32>
    %73 = arith.maximumf %71, %72 : vector<2x128xf32>
    %74 = vector.broadcast %4 : vector<2x1xf32> to vector<2x128xf32>
    %75 = arith.mulf %73, %74 : vector<2x128xf32>
    %76 = arith.truncf %75 : vector<2x128xf32> to vector<2x128xbf16>
    %c0_30 = arith.constant 0 : index
    %c0_31 = arith.constant 0 : index
    %77 = vector.load %arg8[%c0_30, %c0_31] : memref<128x128xbf16, #tpu.memory_space<vmem>>, vector<128x128xbf16>
    %cst_32 = arith.constant dense<0.000000e+00> : vector<2x128xf32>
    %78 = tpu.matmul %76, %77, %cst_32 {dimension_numbers = #tpu.dot_dimension_numbers<[1], [0], [0], [1], [0, 0, 1, 1], [], []>} : vector<2x128xbf16>, vector<128x128xbf16>, vector<2x128xf32> -> vector<2x128xf32>
    %c0_33 = arith.constant 0 : index
    %c0_34 = arith.constant 0 : index
    %79 = vector.load %arg10[%c0_33, %c0_34] : memref<2x128xf32, #tpu.memory_space<vmem>>, vector<2x128xf32>
    tpu.vector_store %arg10[%c0_33, %c0_34], %78 {strides = array<i32>} : memref<2x128xf32, #tpu.memory_space<vmem>>, vector<2x128xf32>,
    return
  }
}

</mosaic_0001>

<llo_original>
// kernel: simclr_forward.3
$region0: #{simclr_forward.3}
  #allocation0 [shape = 'u32[]', space=smem, size = 0x4, offset = 0x4, fixed_abs, tag = 'smem constant byte address 0x4 - core index']
  #allocation1 [shape = 'u32[144,128]{1,0:T(1,128)}', space=vmem, size = 0x12000, scoped, tag = 'internal scratch']
  %s0 = inlined_call_operand.vmem [shape: f32[2,128], index: 0, kind: input, shape index: {}]
  %s1 = inlined_call_operand.vmem [shape: f32[1,128], index: 1, kind: input, shape index: {}]
  %s2 = inlined_call_operand.vmem [shape: f32[1,128], index: 2, kind: input, shape index: {}]
  %s3 = inlined_call_operand.vmem [shape: bf16[128,128], index: 3, kind: input, shape index: {}]
  %s4 = inlined_call_operand.vmem [shape: bf16[128,128], index: 4, kind: input, shape index: {}]
  %s5 = inlined_call_operand.vmem [shape: f32[1,128], index: 5, kind: input, shape index: {}]
  %s6 = inlined_call_operand.vmem [shape: f32[1,128], index: 6, kind: input, shape index: {}]
  %s7 = inlined_call_operand.vmem [shape: f32[1,128], index: 7, kind: input, shape index: {}]
  %s8 = inlined_call_operand.vmem [shape: bf16[128,128], index: 8, kind: input, shape index: {}]
  %s9 = inlined_call_operand.hbm [shape: f32[2,128], index: 9, kind: output, shape index: {0}]
  %s10 = inlined_call_operand.hbm [shape: f32[2,128], index: 10, kind: output, shape index: {1}]
  %11 = xla_tuple %s9, %s10
  %s12 = sld [smem:[#allocation0]]
  $region54: #{simclr_forward.3} parent=0
    _
  %s14 = ssub.s32 1, %s12
  %s15 = scalar_select 0, %s14, %s12
  $region1: #{simclr_forward.3} parent=0
    #allocation2 [shape = 'u8[1024]{0}', space=vmem, size = 0x400, scoped, tag = 'output window, operand 0, single buffered']
    #allocation3 [shape = 's32[1]{0}', space=sflag, size = 0x4, scoped, tag = 'scoped memory for simclr_forward.3']
    #allocation4 [shape = 'u8[1024]{0}', space=vmem, size = 0x400, scoped, tag = 'output window, operand 1, single buffered']
    #allocation5 [shape = 's32[1]{0}', space=sflag, size = 0x4, scoped, tag = 'scoped memory for simclr_forward.3']
    %16 = vsyncpa [#allocation3], 0
    %17 = vsyncpa [#allocation5], 0
    // Predicated region
    $region2: #{simclr_forward.3} parent=1 // pred_check
      _
    $region3: #{simclr_forward.3} parent=1 // pred_check_branch
      %19 = sbr.rel (0) target = $region5
    $region4: #{simclr_forward.3} parent=1 // pred_region
      _
    $region5: #{simclr_forward.3} parent=1 // pred_fallthru
      _
    // Predicated region
    $region6: #{simclr_forward.3} parent=1 // pred_check
      _
    $region7: #{simclr_forward.3} parent=1 // pred_check_branch
      %21 = sbr.rel (0) target = $region9
    $region8: #{simclr_forward.3} parent=1 // pred_region
      _
    $region9: #{simclr_forward.3} parent=1 // pred_fallthru
      _
    // Predicated region
    $region10: #{simclr_forward.3} parent=1 // pred_check
      _
    $region11: #{simclr_forward.3} parent=1 // pred_check_branch
      %23 = sbr.rel (0) target = $region13
    $region12: #{simclr_forward.3} parent=1 // pred_region
      _
    $region13: #{simclr_forward.3} parent=1 // pred_fallthru
      _
    // Predicated region
    $region14: #{simclr_forward.3} parent=1 // pred_check
      _
    $region15: #{simclr_forward.3} parent=1 // pred_check_branch
      %25 = sbr.rel (0) target = $region17
    $region16: #{simclr_forward.3} parent=1 // pred_region
      _
    $region17: #{simclr_forward.3} parent=1 // pred_fallthru
      _
    // Predicated region
    $region18: #{simclr_forward.3} parent=1 // pred_check
      _
    $region19: #{simclr_forward.3} parent=1 // pred_check_branch
      %27 = sbr.rel (0) target = $region21
    $region20: #{simclr_forward.3} parent=1 // pred_region
      _
    $region21: #{simclr_forward.3} parent=1 // pred_fallthru
      _
    // Predicated region
    $region22: #{simclr_forward.3} parent=1 // pred_check
      _
    $region23: #{simclr_forward.3} parent=1 // pred_check_branch
      %29 = sbr.rel (0) target = $region25
    $region24: #{simclr_forward.3} parent=1 // pred_region
      _
    $region25: #{simclr_forward.3} parent=1 // pred_fallthru
      _
    // Predicated region
    $region26: #{simclr_forward.3} parent=1 // pred_check
      _
    $region27: #{simclr_forward.3} parent=1 // pred_check_branch
      %31 = sbr.rel (0) target = $region29
    $region28: #{simclr_forward.3} parent=1 // pred_region
      _
    $region29: #{simclr_forward.3} parent=1 // pred_fallthru
      _
    // Predicated region
    $region30: #{simclr_forward.3} parent=1 // pred_check
      _
    $region31: #{simclr_forward.3} parent=1 // pred_check_branch
      %33 = sbr.rel (0) target = $region33
    $region32: #{simclr_forward.3} parent=1 // pred_region
      _
    $region33: #{simclr_forward.3} parent=1 // pred_fallthru
      _
    // Predicated region
    $region34: #{simclr_forward.3} parent=1 // pred_check
      _
    $region35: #{simclr_forward.3} parent=1 // pred_check_branch
      %35 = sbr.rel (0) target = $region37
    $region36: #{simclr_forward.3} parent=1 // pred_region
      _
    $region37: #{simclr_forward.3} parent=1 // pred_fallthru
      _
    %v37 = vlaneseq
    %v38 = vshrl.u32 %v37, 7
    %vm39 = vcmp.lt.s32.totalorder %v38, 2
    %v40 = vsel %vm39, 1, 0
    %v41 = vcvt.s32.f32 %v40
    %v42 = vld [vmem:[%s0] sm:$0x3]
    %v43 = vmul.f32 %v42, %v41
    %vm44 = vcmask 1041408
    %v45 = vsel %vm44, %v43, 0.0
    %v46 = vrot.slane %v45, 4
    %v47 = vadd.f32 %v45, %v46
    %v48 = vrot.slane %v47, 2
    %v49 = vadd.f32 %v47, %v48
    %v50 = vrot.slane %v49, 1
    %v51 = vadd.f32 %v49, %v50
    %v52 = vmul.f32 %v51, 0.5
    %v53 = vsub.f32 %v43, %v52
    %v54 = vmul.f32 %v53, %v41
    %v55 = vmul.f32 %v54, %v54
    %v56 = vsel %vm44, %v55, 0.0
    %v57 = vrot.slane %v56, 4
    %v58 = vadd.f32 %v56, %v57
    %v59 = vrot.slane %v58, 2
    %v60 = vadd.f32 %v58, %v59
    %v61 = vrot.slane %v60, 1
    %v62 = vadd.f32 %v60, %v61
    %v63 = vmul.f32 %v62, 0.5
    %v64 = vadd.f32 %v63, 1e-05
    %v65 = vrsqrt.pop %v64
    %v66 = vmul.f32 %v54, %v65
    %v67 = vld [vmem:[%s1] sm:$0x1]
    %v69 = vlaneseq
    %v70 = vshrl.u32 %v69, 7
    %v71 = vsub.s32 0, %v70
    %v72 = vrot.slane %v67, %v71
    %v74 = vmul.f32 %v66, %v72
    %v75 = vld [vmem:[%s2] sm:$0x1]
    %v77 = vlaneseq
    %v78 = vshrl.u32 %v77, 7
    %v79 = vsub.s32 0, %v78
    %v80 = vrot.slane %v75, %v79
    %v82 = vadd.f32 %v74, %v80
    %v83 = vmax.f32 %v82, 0.0
    %v84 = vmul.f32 %v83, %v41
    %v85 = vpack.c.bf16 %v84, %v84
    %v86 = vld [vmem:[%s3] sm:$0xf]
    %v87 = vld [vmem:[%s3 + $0x4] sm:$0xf]
    %v88 = vld [vmem:[%s3 + $0x8] sm:$0xf]
    %v89 = vld [vmem:[%s3 + $0xc] sm:$0xf]
    %v90 = vld [vmem:[%s3 + $0x10] sm:$0xf]
    %v91 = vld [vmem:[%s3 + $0x14] sm:$0xf]
    %v92 = vld [vmem:[%s3 + $0x18] sm:$0xf]
    %v93 = vld [vmem:[%s3 + $0x1c] sm:$0xf]
    %v94 = vld [vmem:[%s3 + $0x20] sm:$0xf]
    %v95 = vld [vmem:[%s3 + $0x24] sm:$0xf]
    %v96 = vld [vmem:[%s3 + $0x28] sm:$0xf]
    %v97 = vld [vmem:[%s3 + $0x2c] sm:$0xf]
    %v98 = vld [vmem:[%s3 + $0x30] sm:$0xf]
    %v99 = vld [vmem:[%s3 + $0x34] sm:$0xf]
    %v100 = vld [vmem:[%s3 + $0x38] sm:$0xf]
    %v101 = vld [vmem:[%s3 + $0x3c] sm:$0xf]
    %v118 = vunpack.c.l.b16 %v86
    %v119 = vunpack.c.l.b16 %v87
    %v120 = vunpack.c.l.b16 %v88
    %v121 = vunpack.c.l.b16 %v89
    %v122 = vunpack.c.l.b16 %v90
    %v123 = vunpack.c.l.b16 %v91
    %v124 = vunpack.c.l.b16 %v92
    %v125 = vunpack.c.l.b16 %v93
    %v126 = vunpack.c.l.b16 %v94
    %v127 = vunpack.c.l.b16 %v95
    %v128 = vunpack.c.l.b16 %v96
    %v129 = vunpack.c.l.b16 %v97
    %v130 = vunpack.c.l.b16 %v98
    %v131 = vunpack.c.l.b16 %v99
    %v132 = vunpack.c.l.b16 %v100
    %v133 = vunpack.c.l.b16 %v101
    %v134 = vpack.c.b16 %v119, %v118
    %v135 = vpack.c.b16 %v121, %v120
    %v136 = vpack.c.b16 %v123, %v122
    %v137 = vpack.c.b16 %v125, %v124
    %v138 = vpack.c.b16 %v127, %v126
    %v139 = vpack.c.b16 %v129, %v128
    %v140 = vpack.c.b16 %v131, %v130
    %v141 = vpack.c.b16 %v133, %v132
    %150 = vmatprep.subr.bf16.mxu0 0
    %151 = vmatpush1.bf16.msra.mxu0 %v141
    %152 = vmatprep.subr.bf16.mxu0 0
    %153 = vmatpush1.bf16.msra.mxu0 %v140
    %154 = vmatprep.subr.bf16.mxu0 0
    %155 = vmatpush1.bf16.msra.mxu0 %v139
    %156 = vmatprep.subr.bf16.mxu0 0
    %157 = vmatpush1.bf16.msra.mxu0 %v138
    %158 = vmatprep.subr.bf16.mxu0 0
    %159 = vmatpush1.bf16.msra.mxu0 %v137
    %160 = vmatprep.subr.bf16.mxu0 0
    %161 = vmatpush1.bf16.msra.mxu0 %v136
    %162 = vmatprep.subr.bf16.mxu0 0
    %163 = vmatpush1.bf16.msra.mxu0 %v135
    %164 = vmatprep.subr.bf16.mxu0 0
    %165 = vmatpush1.bf16.msra.mxu0 %v134
    %166 = vmatprep.subr.bf16.mxu0 0
    %167 = vmatpush2.bf16.msra.mxu0 0
    %168 = vmatprep.subr.bf16.mxu0 0
    %169 = vmatpush2.bf16.msra.mxu0 0
    %170 = vmatprep.subr.bf16.mxu0 0
    %171 = vmatpush2.bf16.msra.mxu0 0
    %172 = vmatprep.subr.bf16.mxu0 0
    %173 = vmatpush2.bf16.msra.mxu0 0
    %174 = vmatprep.subr.bf16.mxu0 0
    %175 = vmatpush2.bf16.msra.mxu0 0
    %176 = vmatprep.subr.bf16.mxu0 0
    %177 = vmatpush2.bf16.msra.mxu0 0
    %178 = vmatprep.subr.bf16.mxu0 0
    %179 = vmatpush2.bf16.msra.mxu0 0
    %180 = vmatprep.subr.bf16.mxu0 0
    %181 = vmatpush2.bf16.msra.mxu0 0
    %182 = vmatprep.mubr.bf16.mxu0 0
    %183 = vmatmul.mubr.bf16.gmra.mxu0 %v85
    %v184 = vpop.f32.mrf.mxu0
    %v185 = vadd.f32 0.0, %v184
    %v186 = vpop.f32.mrf.mxu0
    %v187 = vpop.f32.mrf.mxu0
    %v188 = vpop.f32.mrf.mxu0
    %189 = vdwg.mxu0
    %190 = vst [vmem:[#allocation2] sm:$0x3] %v185
    %v191 = vpack.c.bf16 %v185, %v185
    %v192 = vld [vmem:[%s4] sm:$0xf]
    %v193 = vld [vmem:[%s4 + $0x4] sm:$0xf]
    %v194 = vld [vmem:[%s4 + $0x8] sm:$0xf]
    %v195 = vld [vmem:[%s4 + $0xc] sm:$0xf]
    %v196 = vld [vmem:[%s4 + $0x10] sm:$0xf]
    %v197 = vld [vmem:[%s4 + $0x14] sm:$0xf]
    %v198 = vld [vmem:[%s4 + $0x18] sm:$0xf]
    %v199 = vld [vmem:[%s4 + $0x1c] sm:$0xf]
    %v200 = vld [vmem:[%s4 + $0x20] sm:$0xf]
    %v201 = vld [vmem:[%s4 + $0x24] sm:$0xf]
    %v202 = vld [vmem:[%s4 + $0x28] sm:$0xf]
    %v203 = vld [vmem:[%s4 + $0x2c] sm:$0xf]
    %v204 = vld [vmem:[%s4 + $0x30] sm:$0xf]
    %v205 = vld [vmem:[%s4 + $0x34] sm:$0xf]
    %v206 = vld [vmem:[%s4 + $0x38] sm:$0xf]
    %v207 = vld [vmem:[%s4 + $0x3c] sm:$0xf]
    %v208 = vld [vmem:[%s5] sm:$0x1]
    %v210 = vlaneseq
    %v211 = vshrl.u32 %v210, 7
    %v212 = vsub.s32 0, %v211
    %v213 = vrot.slane %v208, %v212
    %v231 = vunpack.c.l.b16 %v192
    %v232 = vunpack.c.l.b16 %v193
    %v233 = vunpack.c.l.b16 %v194
    %v234 = vunpack.c.l.b16 %v195
    %v235 = vunpack.c.l.b16 %v196
    %v236 = vunpack.c.l.b16 %v197
    %v237 = vunpack.c.l.b16 %v198
    %v238 = vunpack.c.l.b16 %v199
    %v239 = vunpack.c.l.b16 %v200
    %v240 = vunpack.c.l.b16 %v201
    %v241 = vunpack.c.l.b16 %v202
    %v242 = vunpack.c.l.b16 %v203
    %v243 = vunpack.c.l.b16 %v204
    %v244 = vunpack.c.l.b16 %v205
    %v245 = vunpack.c.l.b16 %v206
    %v246 = vunpack.c.l.b16 %v207
    %v247 = vpack.c.b16 %v232, %v231
    %v248 = vpack.c.b16 %v234, %v233
    %v249 = vpack.c.b16 %v236, %v235
    %v250 = vpack.c.b16 %v238, %v237
    %v251 = vpack.c.b16 %v240, %v239
    %v252 = vpack.c.b16 %v242, %v241
    %v253 = vpack.c.b16 %v244, %v243
    %v254 = vpack.c.b16 %v246, %v245
    %263 = vmatprep.subr.bf16.mxu0 0
    %264 = vmatpush1.bf16.msra.mxu0 %v254
    %265 = vmatprep.subr.bf16.mxu0 0
    %266 = vmatpush1.bf16.msra.mxu0 %v253
    %267 = vmatprep.subr.bf16.mxu0 0
    %268 = vmatpush1.bf16.msra.mxu0 %v252
    %269 = vmatprep.subr.bf16.mxu0 0
    %270 = vmatpush1.bf16.msra.mxu0 %v251
    %271 = vmatprep.subr.bf16.mxu0 0
    %272 = vmatpush1.bf16.msra.mxu0 %v250
    %273 = vmatprep.subr.bf16.mxu0 0
    %274 = vmatpush1.bf16.msra.mxu0 %v249
    %275 = vmatprep.subr.bf16.mxu0 0
    %276 = vmatpush1.bf16.msra.mxu0 %v248
    %277 = vmatprep.subr.bf16.mxu0 0
    %278 = vmatpush1.bf16.msra.mxu0 %v247
    %279 = vmatprep.subr.bf16.mxu0 0
    %280 = vmatpush2.bf16.msra.mxu0 0
    %281 = vmatprep.subr.bf16.mxu0 0
    %282 = vmatpush2.bf16.msra.mxu0 0
    %283 = vmatprep.subr.bf16.mxu0 0
    %284 = vmatpush2.bf16.msra.mxu0 0
    %285 = vmatprep.subr.bf16.mxu0 0
    %286 = vmatpush2.bf16.msra.mxu0 0
    %287 = vmatprep.subr.bf16.mxu0 0
    %288 = vmatpush2.bf16.msra.mxu0 0
    %289 = vmatprep.subr.bf16.mxu0 0
    %290 = vmatpush2.bf16.msra.mxu0 0
    %291 = vmatprep.subr.bf16.mxu0 0
    %292 = vmatpush2.bf16.msra.mxu0 0
    %293 = vmatprep.subr.bf16.mxu0 0
    %294 = vmatpush2.bf16.msra.mxu0 0
    %295 = vmatprep.mubr.bf16.mxu0 0
    %296 = vmatmul.mubr.bf16.gmra.mxu0 %v191
    %v297 = vpop.f32.mrf.mxu0
    %v298 = vadd.f32 %v213, %v297
    %v299 = vpop.f32.mrf.mxu0
    %v300 = vpop.f32.mrf.mxu0
    %v301 = vpop.f32.mrf.mxu0
    %302 = vdwg.mxu0
    %v303 = vmul.f32 %v298, %v41
    %v304 = vsel %vm44, %v303, 0.0
    %v305 = vrot.slane %v304, 4
    %v306 = vadd.f32 %v304, %v305
    %v307 = vrot.slane %v306, 2
    %v308 = vadd.f32 %v306, %v307
    %v309 = vrot.slane %v308, 1
    %v310 = vadd.f32 %v308, %v309
    %v311 = vmul.f32 %v310, 0.5
    %v312 = vsub.f32 %v303, %v311
    %v313 = vmul.f32 %v312, %v41
    %v314 = vmul.f32 %v313, %v313
    %v315 = vsel %vm44, %v314, 0.0
    %v316 = vrot.slane %v315, 4
    %v317 = vadd.f32 %v315, %v316
    %v318 = vrot.slane %v317, 2
    %v319 = vadd.f32 %v317, %v318
    %v320 = vrot.slane %v319, 1
    %v321 = vadd.f32 %v319, %v320
    %v322 = vmul.f32 %v321, 0.5
    %v323 = vadd.f32 %v322, 1e-05
    %v324 = vrsqrt.pop %v323
    %v325 = vmul.f32 %v313, %v324
    %v326 = vld [vmem:[%s6] sm:$0x1]
    %v328 = vlaneseq
    %v329 = vshrl.u32 %v328, 7
    %v330 = vsub.s32 0, %v329
    %v331 = vrot.slane %v326, %v330
    %v333 = vmul.f32 %v325, %v331
    %v334 = vld [vmem:[%s7] sm:$0x1]
    %v336 = vlaneseq
    %v337 = vshrl.u32 %v336, 7
    %v338 = vsub.s32 0, %v337
    %v339 = vrot.slane %v334, %v338
    %v341 = vadd.f32 %v333, %v339
    %v342 = vmax.f32 %v341, 0.0
    %v343 = vmul.f32 %v342, %v41
    %v344 = vpack.c.bf16 %v343, %v343
    %v345 = vld [vmem:[%s8] sm:$0xf]
    %v346 = vld [vmem:[%s8 + $0x4] sm:$0xf]
    %v347 = vld [vmem:[%s8 + $0x8] sm:$0xf]
    %v348 = vld [vmem:[%s8 + $0xc] sm:$0xf]
    %v349 = vld [vmem:[%s8 + $0x10] sm:$0xf]
    %v350 = vld [vmem:[%s8 + $0x14] sm:$0xf]
    %v351 = vld [vmem:[%s8 + $0x18] sm:$0xf]
    %v352 = vld [vmem:[%s8 + $0x1c] sm:$0xf]
    %v353 = vld [vmem:[%s8 + $0x20] sm:$0xf]
    %v354 = vld [vmem:[%s8 + $0x24] sm:$0xf]
    %v355 = vld [vmem:[%s8 + $0x28] sm:$0xf]
    %v356 = vld [vmem:[%s8 + $0x2c] sm:$0xf]
    %v357 = vld [vmem:[%s8 + $0x30] sm:$0xf]
    %v358 = vld [vmem:[%s8 + $0x34] sm:$0xf]
    %v359 = vld [vmem:[%s8 + $0x38] sm:$0xf]
    %v360 = vld [vmem:[%s8 + $0x3c] sm:$0xf]
    %v377 = vunpack.c.l.b16 %v345
    %v378 = vunpack.c.l.b16 %v346
    %v379 = vunpack.c.l.b16 %v347
    %v380 = vunpack.c.l.b16 %v348
    %v381 = vunpack.c.l.b16 %v349
    %v382 = vunpack.c.l.b16 %v350
    %v383 = vunpack.c.l.b16 %v351
    %v384 = vunpack.c.l.b16 %v352
    %v385 = vunpack.c.l.b16 %v353
    %v386 = vunpack.c.l.b16 %v354
    %v387 = vunpack.c.l.b16 %v355
    %v388 = vunpack.c.l.b16 %v356
    %v389 = vunpack.c.l.b16 %v357
    %v390 = vunpack.c.l.b16 %v358
    %v391 = vunpack.c.l.b16 %v359
    %v392 = vunpack.c.l.b16 %v360
    %v393 = vpack.c.b16 %v378, %v377
    %v394 = vpack.c.b16 %v380, %v379
    %v395 = vpack.c.b16 %v382, %v381
    %v396 = vpack.c.b16 %v384, %v383
    %v397 = vpack.c.b16 %v386, %v385
    %v398 = vpack.c.b16 %v388, %v387
    %v399 = vpack.c.b16 %v390, %v389
    %v400 = vpack.c.b16 %v392, %v391
    %409 = vmatprep.subr.bf16.mxu0 0
    %410 = vmatpush1.bf16.msra.mxu0 %v400
    %411 = vmatprep.subr.bf16.mxu0 0
    %412 = vmatpush1.bf16.msra.mxu0 %v399
    %413 = vmatprep.subr.bf16.mxu0 0
    %414 = vmatpush1.bf16.msra.mxu0 %v398
    %415 = vmatprep.subr.bf16.mxu0 0
    %416 = vmatpush1.bf16.msra.mxu0 %v397
    %417 = vmatprep.subr.bf16.mxu0 0
    %418 = vmatpush1.bf16.msra.mxu0 %v396
    %419 = vmatprep.subr.bf16.mxu0 0
    %420 = vmatpush1.bf16.msra.mxu0 %v395
    %421 = vmatprep.subr.bf16.mxu0 0
    %422 = vmatpush1.bf16.msra.mxu0 %v394
    %423 = vmatprep.subr.bf16.mxu0 0
    %424 = vmatpush1.bf16.msra.mxu0 %v393
    %425 = vmatprep.subr.bf16.mxu0 0
    %426 = vmatpush2.bf16.msra.mxu0 0
    %427 = vmatprep.subr.bf16.mxu0 0
    %428 = vmatpush2.bf16.msra.mxu0 0
    %429 = vmatprep.subr.bf16.mxu0 0
    %430 = vmatpush2.bf16.msra.mxu0 0
    %431 = vmatprep.subr.bf16.mxu0 0
    %432 = vmatpush2.bf16.msra.mxu0 0
    %433 = vmatprep.subr.bf16.mxu0 0
    %434 = vmatpush2.bf16.msra.mxu0 0
    %435 = vmatprep.subr.bf16.mxu0 0
    %436 = vmatpush2.bf16.msra.mxu0 0
    %437 = vmatprep.subr.bf16.mxu0 0
    %438 = vmatpush2.bf16.msra.mxu0 0
    %439 = vmatprep.subr.bf16.mxu0 0
    %440 = vmatpush2.bf16.msra.mxu0 0
    %441 = vmatprep.mubr.bf16.mxu0 0
    %442 = vmatmul.mubr.bf16.gmra.mxu0 %v344
    %v443 = vpop.f32.mrf.mxu0
    %v444 = vadd.f32 0.0, %v443
    %v445 = vpop.f32.mrf.mxu0
    %v446 = vpop.f32.mrf.mxu0
    %v447 = vpop.f32.mrf.mxu0
    %448 = vdwg.mxu0
    %449 = vst [vmem:[#allocation4] sm:$0x3] %v444
    // Predicated region
    $region38: #{simclr_forward.3} parent=1 // pred_check
      _
    $region39: #{simclr_forward.3} parent=1 // pred_check_branch
      %451 = sbr.rel (0) target = $region41
    $region40: #{simclr_forward.3} parent=1 // pred_region
      %s453 = ssub.s32 32, 32
      %454 = vsyncadd [#allocation3], %s453
      %s456 = sshll.u32 [#allocation2], 4
      %s457 = int_to_ptr.vmem [resolvable:$true] %s456
      %459 = dma.vmem_to_hbm [thread:$0]  %s457, 32, %s9, [#allocation3]
    $region41: #{simclr_forward.3} parent=1 // pred_fallthru
      _
    // Predicated region
    $region42: #{simclr_forward.3} parent=1 // pred_check
      _
    $region43: #{simclr_forward.3} parent=1 // pred_check_branch
      %461 = sbr.rel (0) target = $region45
    $region44: #{simclr_forward.3} parent=1 // pred_region
      %s463 = ssub.s32 32, 32
      %464 = vsyncadd [#allocation5], %s463
      %s466 = sshll.u32 [#allocation4], 4
      %s467 = int_to_ptr.vmem [resolvable:$true] %s466
      %469 = dma.vmem_to_hbm [thread:$0]  %s467, 32, %s10, [#allocation5]
    $region45: #{simclr_forward.3} parent=1 // pred_fallthru
      _
    // Predicated region
    $region46: #{simclr_forward.3} parent=1 // pred_check
      _
    $region47: #{simclr_forward.3} parent=1 // pred_check_branch
      %471 = sbr.rel (0) target = $region49
    $region48: #{simclr_forward.3} parent=1 // pred_region
      %472 = dma.done [#allocation3], 32
    $region49: #{simclr_forward.3} parent=1 // pred_fallthru
      _
    // Predicated region
    $region50: #{simclr_forward.3} parent=1 // pred_check
      _
    $region51: #{simclr_forward.3} parent=1 // pred_check_branch
      %474 = sbr.rel (0) target = $region53
    $region52: #{simclr_forward.3} parent=1 // pred_region
      %475 = dma.done [#allocation5], 32
    $region53: #{simclr_forward.3} parent=1 // pred_fallthru
      _
    %476 = vsyncpa [#allocation3], 1
    %477 = vsyncpa [#allocation5], 1

// kernel: simclr_forward.2
$region0: #{simclr_forward.2}
  #allocation0 [shape = 'u32[]', space=smem, size = 0x4, offset = 0x4, fixed_abs, tag = 'smem constant byte address 0x4 - core index']
  #allocation1 [shape = 'u32[144,128]{1,0:T(1,128)}', space=vmem, size = 0x12000, scoped, tag = 'internal scratch']
  %s0 = inlined_call_operand.vmem [shape: bf16[512,36], index: 0, kind: input, shape index: {}]
  %s1 = inlined_call_operand.vmem [shape: bf16[36,128], index: 1, kind: input, shape index: {}]
  %s2 = inlined_call_operand.vmem [shape: f32[1,128], index: 2, kind: input, shape index: {}]
  %s3 = inlined_call_operand.vmem [shape: f32[2,512], index: 3, kind: input, shape index: {}]
  %s4 = inlined_call_operand.vmem [shape: f32[2,128], index: 4, kind: output, shape index: {}]
  %s5 = sld [smem:[#allocation0]]
  $region26: #{simclr_forward.2} parent=0
    _
  %s7 = ssub.s32 1, %s5
  %s8 = scalar_select 0, %s7, %s5
  // Predicated region
  $region2: #{simclr_forward.2} parent=0 // pred_check
    _
  $region3: #{simclr_forward.2} parent=0 // pred_check_branch
    %10 = sbr.rel (0) target = $region5
  $region4: #{simclr_forward.2} parent=0 // pred_region
    _
  $region5: #{simclr_forward.2} parent=0 // pred_fallthru
    _
  // Predicated region
  $region6: #{simclr_forward.2} parent=0 // pred_check
    _
  $region7: #{simclr_forward.2} parent=0 // pred_check_branch
    %12 = sbr.rel (0) target = $region9
  $region8: #{simclr_forward.2} parent=0 // pred_region
    _
  $region9: #{simclr_forward.2} parent=0 // pred_fallthru
    _
  // Predicated region
  $region10: #{simclr_forward.2} parent=0 // pred_check
    _
  $region11: #{simclr_forward.2} parent=0 // pred_check_branch
    %14 = sbr.rel (0) target = $region13
  $region12: #{simclr_forward.2} parent=0 // pred_region
    _
  $region13: #{simclr_forward.2} parent=0 // pred_fallthru
    _
  // Predicated region
  $region14: #{simclr_forward.2} parent=0 // pred_check
    _
  $region15: #{simclr_forward.2} parent=0 // pred_check_branch
    %16 = sbr.rel (0) target = $region17
  $region16: #{simclr_forward.2} parent=0 // pred_region
    _
  $region17: #{simclr_forward.2} parent=0 // pred_fallthru
    _
  %v18 = vld [vmem:[%s0] sm:$0xf]
  %v19 = vld [vmem:[%s0 + $0x4] sm:$0xf]
  %v20 = vld [vmem:[%s0 + $0x8] sm:$0xf]
  %v21 = vld [vmem:[%s0 + $0xc] sm:$0xf]
  %v22 = vld [vmem:[%s0 + $0x10] sm:$0xf]
  %v23 = vld [vmem:[%s0 + $0x14] sm:$0xf]
  %v24 = vld [vmem:[%s0 + $0x18] sm:$0xf]
  %v25 = vld [vmem:[%s0 + $0x1c] sm:$0xf]
  %v26 = vld [vmem:[%s0 + $0x20] sm:$0xf]
  %v27 = vld [vmem:[%s0 + $0x24] sm:$0xf]
  %v28 = vld [vmem:[%s0 + $0x28] sm:$0xf]
  %v29 = vld [vmem:[%s0 + $0x2c] sm:$0xf]
  %v30 = vld [vmem:[%s0 + $0x30] sm:$0xf]
  %v31 = vld [vmem:[%s0 + $0x34] sm:$0xf]
  %v32 = vld [vmem:[%s0 + $0x38] sm:$0xf]
  %v33 = vld [vmem:[%s0 + $0x3c] sm:$0xf]
  %v34 = vld [vmem:[%s0 + $0x40] sm:$0xf]
  %v35 = vld [vmem:[%s0 + $0x44] sm:$0xf]
  %v36 = vld [vmem:[%s0 + $0x48] sm:$0xf]
  %v37 = vld [vmem:[%s0 + $0x4c] sm:$0xf]
  %v38 = vld [vmem:[%s0 + $0x50] sm:$0xf]
  %v39 = vld [vmem:[%s0 + $0x54] sm:$0xf]
  %v40 = vld [vmem:[%s0 + $0x58] sm:$0xf]
  %v41 = vld [vmem:[%s0 + $0x5c] sm:$0xf]
  %v42 = vld [vmem:[%s0 + $0x60] sm:$0xf]
  %v43 = vld [vmem:[%s0 + $0x64] sm:$0xf]
  %v44 = vld [vmem:[%s0 + $0x68] sm:$0xf]
  %v45 = vld [vmem:[%s0 + $0x6c] sm:$0xf]
  %v46 = vld [vmem:[%s0 + $0x70] sm:$0xf]
  %v47 = vld [vmem:[%s0 + $0x74] sm:$0xf]
  %v48 = vld [vmem:[%s0 + $0x78] sm:$0xf]
  %v49 = vld [vmem:[%s0 + $0x7c] sm:$0xf]
  %v50 = vld [vmem:[%s0 + $0x80] sm:$0xf]
  %v51 = vld [vmem:[%s0 + $0x84] sm:$0xf]
  %v52 = vld [vmem:[%s0 + $0x88] sm:$0xf]
  %v53 = vld [vmem:[%s0 + $0x8c] sm:$0xf]
  %v54 = vld [vmem:[%s0 + $0x90] sm:$0xf]
  %v55 = vld [vmem:[%s0 + $0x94] sm:$0xf]
  %v56 = vld [vmem:[%s0 + $0x98] sm:$0xf]
  %v57 = vld [vmem:[%s0 + $0x9c] sm:$0xf]
  %v58 = vld [vmem:[%s0 + $0xa0] sm:$0xf]
  %v59 = vld [vmem:[%s0 + $0xa4] sm:$0xf]
  %v60 = vld [vmem:[%s0 + $0xa8] sm:$0xf]
  %v61 = vld [vmem:[%s0 + $0xac] sm:$0xf]
  %v62 = vld [vmem:[%s0 + $0xb0] sm:$0xf]
  %v63 = vld [vmem:[%s0 + $0xb4] sm:$0xf]
  %v64 = vld [vmem:[%s0 + $0xb8] sm:$0xf]
  %v65 = vld [vmem:[%s0 + $0xbc] sm:$0xf]
  %v66 = vld [vmem:[%s0 + $0xc0] sm:$0xf]
  %v67 = vld [vmem:[%s0 + $0xc4] sm:$0xf]
  %v68 = vld [vmem:[%s0 + $0xc8] sm:$0xf]
  %v69 = vld [vmem:[%s0 + $0xcc] sm:$0xf]
  %v70 = vld [vmem:[%s0 + $0xd0] sm:$0xf]
  %v71 = vld [vmem:[%s0 + $0xd4] sm:$0xf]
  %v72 = vld [vmem:[%s0 + $0xd8] sm:$0xf]
  %v73 = vld [vmem:[%s0 + $0xdc] sm:$0xf]
  %v74 = vld [vmem:[%s0 + $0xe0] sm:$0xf]
  %v75 = vld [vmem:[%s0 + $0xe4] sm:$0xf]
  %v76 = vld [vmem:[%s0 + $0xe8] sm:$0xf]
  %v77 = vld [vmem:[%s0 + $0xec] sm:$0xf]
  %v78 = vld [vmem:[%s0 + $0xf0] sm:$0xf]
  %v79 = vld [vmem:[%s0 + $0xf4] sm:$0xf]
  %v80 = vld [vmem:[%s0 + $0xf8] sm:$0xf]
  %v81 = vld [vmem:[%s0 + $0xfc] sm:$0xf]
  %v82 = vld [vmem:[%s1] sm:$0xf]
  %v83 = vld [vmem:[%s1 + $0x4] sm:$0xf]
  %v84 = vld [vmem:[%s1 + $0x8] sm:$0xf]
  %v85 = vld [vmem:[%s1 + $0xc] sm:$0xf]
  %v86 = vld [vmem:[%s1 + $0x10] sm:$0x3]
  %v87 = vld [vmem:[%s2] sm:$0x1]
  %v89 = vlaneseq
  %v90 = vshrl.u32 %v89, 7
  %v91 = vsub.s32 0, %v90
  %v92 = vrot.slane %v87, %v91
  %v158 = vunpack.c.l.b16 %v18
  %v159 = vunpack.c.l.b16 %v19
  %v160 = vunpack.c.l.b16 %v20
  %v161 = vunpack.c.l.b16 %v21
  %v162 = vunpack.c.l.b16 %v22
  %v163 = vunpack.c.l.b16 %v23
  %v164 = vunpack.c.l.b16 %v24
  %v165 = vunpack.c.l.b16 %v25
  %v166 = vunpack.c.l.b16 %v26
  %v167 = vunpack.c.l.b16 %v27
  %v168 = vunpack.c.l.b16 %v28
  %v169 = vunpack.c.l.b16 %v29
  %v170 = vunpack.c.l.b16 %v30
  %v171 = vunpack.c.l.b16 %v31
  %v172 = vunpack.c.l.b16 %v32
  %v173 = vunpack.c.l.b16 %v33
  %v174 = vunpack.c.l.b16 %v34
  %v175 = vunpack.c.l.b16 %v35
  %v176 = vunpack.c.l.b16 %v36
  %v177 = vunpack.c.l.b16 %v37
  %v178 = vunpack.c.l.b16 %v38
  %v179 = vunpack.c.l.b16 %v39
  %v180 = vunpack.c.l.b16 %v40
  %v181 = vunpack.c.l.b16 %v41
  %v182 = vunpack.c.l.b16 %v42
  %v183 = vunpack.c.l.b16 %v43
  %v184 = vunpack.c.l.b16 %v44
  %v185 = vunpack.c.l.b16 %v45
  %v186 = vunpack.c.l.b16 %v46
  %v187 = vunpack.c.l.b16 %v47
  %v188 = vunpack.c.l.b16 %v48
  %v189 = vunpack.c.l.b16 %v49
  %v190 = vunpack.c.l.b16 %v50
  %v191 = vunpack.c.l.b16 %v51
  %v192 = vunpack.c.l.b16 %v52
  %v193 = vunpack.c.l.b16 %v53
  %v194 = vunpack.c.l.b16 %v54
  %v195 = vunpack.c.l.b16 %v55
  %v196 = vunpack.c.l.b16 %v56
  %v197 = vunpack.c.l.b16 %v57
  %v198 = vunpack.c.l.b16 %v58
  %v199 = vunpack.c.l.b16 %v59
  %v200 = vunpack.c.l.b16 %v60
  %v201 = vunpack.c.l.b16 %v61
  %v202 = vunpack.c.l.b16 %v62
  %v203 = vunpack.c.l.b16 %v63
  %v204 = vunpack.c.l.b16 %v64
  %v205 = vunpack.c.l.b16 %v65
  %v206 = vunpack.c.l.b16 %v66
  %v207 = vunpack.c.l.b16 %v67
  %v208 = vunpack.c.l.b16 %v68
  %v209 = vunpack.c.l.b16 %v69
  %v210 = vunpack.c.l.b16 %v70
  %v211 = vunpack.c.l.b16 %v71
  %v212 = vunpack.c.l.b16 %v72
  %v213 = vunpack.c.l.b16 %v73
  %v214 = vunpack.c.l.b16 %v74
  %v215 = vunpack.c.l.b16 %v75
  %v216 = vunpack.c.l.b16 %v76
  %v217 = vunpack.c.l.b16 %v77
  %v218 = vunpack.c.l.b16 %v78
  %v219 = vunpack.c.l.b16 %v79
  %v220 = vunpack.c.l.b16 %v80
  %v221 = vunpack.c.l.b16 %v81
  %v222 = vpack.c.b16 %v159, %v158
  %v223 = vpack.c.b16 %v161, %v160
  %v224 = vpack.c.b16 %v163, %v162
  %v225 = vpack.c.b16 %v165, %v164
  %v226 = vpack.c.b16 %v167, %v166
  %v227 = vpack.c.b16 %v169, %v168
  %v228 = vpack.c.b16 %v171, %v170
  %v229 = vpack.c.b16 %v173, %v172
  %v230 = vpack.c.b16 %v175, %v174
  %v231 = vpack.c.b16 %v177, %v176
  %v232 = vpack.c.b16 %v179, %v178
  %v233 = vpack.c.b16 %v181, %v180
  %v234 = vpack.c.b16 %v183, %v182
  %v235 = vpack.c.b16 %v185, %v184
  %v236 = vpack.c.b16 %v187, %v186
  %v237 = vpack.c.b16 %v189, %v188
  %v238 = vpack.c.b16 %v191, %v190
  %v239 = vpack.c.b16 %v193, %v192
  %v240 = vpack.c.b16 %v195, %v194
  %v241 = vpack.c.b16 %v197, %v196
  %v242 = vpack.c.b16 %v199, %v198
  %v243 = vpack.c.b16 %v201, %v200
  %v244 = vpack.c.b16 %v203, %v202
  %v245 = vpack.c.b16 %v205, %v204
  %v246 = vpack.c.b16 %v207, %v206
  %v247 = vpack.c.b16 %v209, %v208
  %v248 = vpack.c.b16 %v211, %v210
  %v249 = vpack.c.b16 %v213, %v212
  %v250 = vpack.c.b16 %v215, %v214
  %v251 = vpack.c.b16 %v217, %v216
  %v252 = vpack.c.b16 %v219, %v218
  %v253 = vpack.c.b16 %v221, %v220
  %v259 = vunpack.c.l.b16 %v82
  %v260 = vunpack.c.l.b16 %v83
  %v261 = vunpack.c.l.b16 %v84
  %v262 = vunpack.c.l.b16 %v85
  %v263 = vunpack.c.l.b16 %v86
  %v264 = vpack.c.b16 %v260, %v259
  %v265 = vpack.c.b16 %v262, %v261
  %v266 = vpack.c.b16 %v263, %v263
  %vm269 = vcmask 293888
  %v271 = vsel %vm269, %v222, 0
  %v274 = vsel %vm269, %v223, 0
  %v277 = vsel %vm269, %v224, 0
  %v280 = vsel %vm269, %v225, 0
  %v283 = vsel %vm269, %v226, 0
  %v286 = vsel %vm269, %v227, 0
  %v289 = vsel %vm269, %v228, 0
  %v292 = vsel %vm269, %v229, 0
  %v295 = vsel %vm269, %v230, 0
  %v298 = vsel %vm269, %v231, 0
  %v301 = vsel %vm269, %v232, 0
  %v304 = vsel %vm269, %v233, 0
  %v307 = vsel %vm269, %v234, 0
  %v310 = vsel %vm269, %v235, 0
  %v313 = vsel %vm269, %v236, 0
  %v316 = vsel %vm269, %v237, 0
  %v319 = vsel %vm269, %v238, 0
  %v322 = vsel %vm269, %v239, 0
  %v325 = vsel %vm269, %v240, 0
  %v328 = vsel %vm269, %v241, 0
  %v331 = vsel %vm269, %v242, 0
  %v334 = vsel %vm269, %v243, 0
  %v337 = vsel %vm269, %v244, 0
  %v340 = vsel %vm269, %v245, 0
  %v343 = vsel %vm269, %v246, 0
  %v346 = vsel %vm269, %v247, 0
  %v349 = vsel %vm269, %v248, 0
  %v352 = vsel %vm269, %v249, 0
  %v355 = vsel %vm269, %v250, 0
  %v358 = vsel %vm269, %v251, 0
  %v361 = vsel %vm269, %v252, 0
  %v364 = vsel %vm269, %v253, 0
  %vm366 = vcmask 1041408
  %v368 = vsel %vm366, %v266, 0
  %370 = vmatprep.subr.bf16.mxu0 0
  %371 = vmatpush1.bf16.msra.mxu0 0
  %372 = vmatprep.subr.bf16.mxu0 0
  %373 = vmatpush1.bf16.msra.mxu0 0
  %374 = vmatprep.subr.bf16.mxu0 0
  %375 = vmatpush1.bf16.msra.mxu0 0
  %376 = vmatprep.subr.bf16.mxu0 0
  %377 = vmatpush1.bf16.msra.mxu0 0
  %378 = vmatprep.subr.bf16.mxu0 0
  %379 = vmatpush1.bf16.msra.mxu0 0
  %380 = vmatprep.subr.bf16.mxu0 0
  %381 = vmatpush1.bf16.msra.mxu0 %v368
  %382 = vmatprep.subr.bf16.mxu0 0
  %383 = vmatpush1.bf16.msra.mxu0 %v265
  %384 = vmatprep.subr.bf16.mxu0 0
  %385 = vmatpush1.bf16.msra.mxu0 %v264
  %386 = vmatprep.subr.bf16.mxu0 0
  %387 = vmatpush2.bf16.msra.mxu0 0
  %388 = vmatprep.subr.bf16.mxu0 0
  %389 = vmatpush2.bf16.msra.mxu0 0
  %390 = vmatprep.subr.bf16.mxu0 0
  %391 = vmatpush2.bf16.msra.mxu0 0
  %392 = vmatprep.subr.bf16.mxu0 0
  %393 = vmatpush2.bf16.msra.mxu0 0
  %394 = vmatprep.subr.bf16.mxu0 0
  %395 = vmatpush2.bf16.msra.mxu0 0
  %396 = vmatprep.subr.bf16.mxu0 0
  %397 = vmatpush2.bf16.msra.mxu0 0
  %398 = vmatprep.subr.bf16.mxu0 0
  %399 = vmatpush2.bf16.msra.mxu0 0
  %400 = vmatprep.subr.bf16.mxu0 0
  %401 = vmatpush2.bf16.msra.mxu0 0
  %402 = vmatprep.mubr.bf16.mxu0 0
  %403 = vmatmul.mubr.bf16.gmra.mxu0 %v271
  %v404 = vpop.f32.mrf.mxu0
  %v405 = vadd.f32 %v92, %v404
  %v406 = vpop.f32.mrf.mxu0
  %v407 = vpop.f32.mrf.mxu0
  %v408 = vadd.f32 %v92, %v407
  %v409 = vpop.f32.mrf.mxu0
  %410 = vmatprep.mubr.bf16.mxu0 0
  %411 = vmatmul.mubr.bf16.gmra.mxu0 %v274
  %v412 = vpop.f32.mrf.mxu0
  %v413 = vadd.f32 %v92, %v412
  %v414 = vpop.f32.mrf.mxu0
  %v415 = vpop.f32.mrf.mxu0
  %v416 = vadd.f32 %v92, %v415
  %v417 = vpop.f32.mrf.mxu0
  %418 = vmatprep.mubr.bf16.mxu0 0
  %419 = vmatmul.mubr.bf16.gmra.mxu0 %v277
  %v420 = vpop.f32.mrf.mxu0
  %v421 = vadd.f32 %v92, %v420
  %v422 = vpop.f32.mrf.mxu0
  %v423 = vpop.f32.mrf.mxu0
  %v424 = vadd.f32 %v92, %v423
  %v425 = vpop.f32.mrf.mxu0
  %426 = vmatprep.mubr.bf16.mxu0 0
  %427 = vmatmul.mubr.bf16.gmra.mxu0 %v280
  %v428 = vpop.f32.mrf.mxu0
  %v429 = vadd.f32 %v92, %v428
  %v430 = vpop.f32.mrf.mxu0
  %v431 = vpop.f32.mrf.mxu0
  %v432 = vadd.f32 %v92, %v431
  %v433 = vpop.f32.mrf.mxu0
  %434 = vmatprep.mubr.bf16.mxu0 0
  %435 = vmatmul.mubr.bf16.gmra.mxu0 %v283
  %v436 = vpop.f32.mrf.mxu0
  %v437 = vadd.f32 %v92, %v436
  %v438 = vpop.f32.mrf.mxu0
  %v439 = vpop.f32.mrf.mxu0
  %v440 = vadd.f32 %v92, %v439
  %v441 = vpop.f32.mrf.mxu0
  %442 = vmatprep.mubr.bf16.mxu0 0
  %443 = vmatmul.mubr.bf16.gmra.mxu0 %v286
  %v444 = vpop.f32.mrf.mxu0
  %v445 = vadd.f32 %v92, %v444
  %v446 = vpop.f32.mrf.mxu0
  %v447 = vpop.f32.mrf.mxu0
  %v448 = vadd.f32 %v92, %v447
  %v449 = vpop.f32.mrf.mxu0
  %450 = vmatprep.mubr.bf16.mxu0 0
  %451 = vmatmul.mubr.bf16.gmra.mxu0 %v289
  %v452 = vpop.f32.mrf.mxu0
  %v453 = vadd.f32 %v92, %v452
  %v454 = vpop.f32.mrf.mxu0
  %v455 = vpop.f32.mrf.mxu0
  %v456 = vadd.f32 %v92, %v455
  %v457 = vpop.f32.mrf.mxu0
  %458 = vmatprep.mubr.bf16.mxu0 0
  %459 = vmatmul.mubr.bf16.gmra.mxu0 %v292
  %v460 = vpop.f32.mrf.mxu0
  %v461 = vadd.f32 %v92, %v460
  %v462 = vpop.f32.mrf.mxu0
  %v463 = vpop.f32.mrf.mxu0
  %v464 = vadd.f32 %v92, %v463
  %v465 = vpop.f32.mrf.mxu0
  %466 = vmatprep.mubr.bf16.mxu0 0
  %467 = vmatmul.mubr.bf16.gmra.mxu0 %v295
  %v468 = vpop.f32.mrf.mxu0
  %v469 = vadd.f32 %v92, %v468
  %v470 = vpop.f32.mrf.mxu0
  %v471 = vpop.f32.mrf.mxu0
  %v472 = vadd.f32 %v92, %v471
  %v473 = vpop.f32.mrf.mxu0
  %474 = vmatprep.mubr.bf16.mxu0 0
  %475 = vmatmul.mubr.bf16.gmra.mxu0 %v298
  %v476 = vpop.f32.mrf.mxu0
  %v477 = vadd.f32 %v92, %v476
  %v478 = vpop.f32.mrf.mxu0
  %v479 = vpop.f32.mrf.mxu0
  %v480 = vadd.f32 %v92, %v479
  %v481 = vpop.f32.mrf.mxu0
  %482 = vmatprep.mubr.bf16.mxu0 0
  %483 = vmatmul.mubr.bf16.gmra.mxu0 %v301
  %v484 = vpop.f32.mrf.mxu0
  %v485 = vadd.f32 %v92, %v484
  %v486 = vpop.f32.mrf.mxu0
  %v487 = vpop.f32.mrf.mxu0
  %v488 = vadd.f32 %v92, %v487
  %v489 = vpop.f32.mrf.mxu0
  %490 = vmatprep.mubr.bf16.mxu0 0
  %491 = vmatmul.mubr.bf16.gmra.mxu0 %v304
  %v492 = vpop.f32.mrf.mxu0
  %v493 = vadd.f32 %v92, %v492
  %v494 = vpop.f32.mrf.mxu0
  %v495 = vpop.f32.mrf.mxu0
  %v496 = vadd.f32 %v92, %v495
  %v497 = vpop.f32.mrf.mxu0
  %498 = vmatprep.mubr.bf16.mxu0 0
  %499 = vmatmul.mubr.bf16.gmra.mxu0 %v307
  %v500 = vpop.f32.mrf.mxu0
  %v501 = vadd.f32 %v92, %v500
  %v502 = vpop.f32.mrf.mxu0
  %v503 = vpop.f32.mrf.mxu0
  %v504 = vadd.f32 %v92, %v503
  %v505 = vpop.f32.mrf.mxu0
  %506 = vmatprep.mubr.bf16.mxu0 0
  %507 = vmatmul.mubr.bf16.gmra.mxu0 %v310
  %v508 = vpop.f32.mrf.mxu0
  %v509 = vadd.f32 %v92, %v508
  %v510 = vpop.f32.mrf.mxu0
  %v511 = vpop.f32.mrf.mxu0
  %v512 = vadd.f32 %v92, %v511
  %v513 = vpop.f32.mrf.mxu0
  %514 = vmatprep.mubr.bf16.mxu0 0
  %515 = vmatmul.mubr.bf16.gmra.mxu0 %v313
  %v516 = vpop.f32.mrf.mxu0
  %v517 = vadd.f32 %v92, %v516
  %v518 = vpop.f32.mrf.mxu0
  %v519 = vpop.f32.mrf.mxu0
  %v520 = vadd.f32 %v92, %v519
  %v521 = vpop.f32.mrf.mxu0
  %522 = vmatprep.mubr.bf16.mxu0 0
  %523 = vmatmul.mubr.bf16.gmra.mxu0 %v316
  %v524 = vpop.f32.mrf.mxu0
  %v525 = vadd.f32 %v92, %v524
  %v526 = vpop.f32.mrf.mxu0
  %v527 = vpop.f32.mrf.mxu0
  %v528 = vadd.f32 %v92, %v527
  %v529 = vpop.f32.mrf.mxu0
  %530 = vmatprep.mubr.bf16.mxu0 0
  %531 = vmatmul.mubr.bf16.gmra.mxu0 %v319
  %v532 = vpop.f32.mrf.mxu0
  %v533 = vadd.f32 %v92, %v532
  %v534 = vpop.f32.mrf.mxu0
  %v535 = vpop.f32.mrf.mxu0
  %v536 = vadd.f32 %v92, %v535
  %v537 = vpop.f32.mrf.mxu0
  %538 = vmatprep.mubr.bf16.mxu0 0
  %539 = vmatmul.mubr.bf16.gmra.mxu0 %v322
  %v540 = vpop.f32.mrf.mxu0
  %v541 = vadd.f32 %v92, %v540
  %v542 = vpop.f32.mrf.mxu0
  %v543 = vpop.f32.mrf.mxu0
  %v544 = vadd.f32 %v92, %v543
  %v545 = vpop.f32.mrf.mxu0
  %546 = vmatprep.mubr.bf16.mxu0 0
  %547 = vmatmul.mubr.bf16.gmra.mxu0 %v325
  %v548 = vpop.f32.mrf.mxu0
  %v549 = vadd.f32 %v92, %v548
  %v550 = vpop.f32.mrf.mxu0
  %v551 = vpop.f32.mrf.mxu0
  %v552 = vadd.f32 %v92, %v551
  %v553 = vpop.f32.mrf.mxu0
  %554 = vmatprep.mubr.bf16.mxu0 0
  %555 = vmatmul.mubr.bf16.gmra.mxu0 %v328
  %v556 = vpop.f32.mrf.mxu0
  %v557 = vadd.f32 %v92, %v556
  %v558 = vpop.f32.mrf.mxu0
  %v559 = vpop.f32.mrf.mxu0
  %v560 = vadd.f32 %v92, %v559
  %v561 = vpop.f32.mrf.mxu0
  %562 = vmatprep.mubr.bf16.mxu0 0
  %563 = vmatmul.mubr.bf16.gmra.mxu0 %v331
  %v564 = vpop.f32.mrf.mxu0
  %v565 = vadd.f32 %v92, %v564
  %v566 = vpop.f32.mrf.mxu0
  %v567 = vpop.f32.mrf.mxu0
  %v568 = vadd.f32 %v92, %v567
  %v569 = vpop.f32.mrf.mxu0
  %570 = vmatprep.mubr.bf16.mxu0 0
  %571 = vmatmul.mubr.bf16.gmra.mxu0 %v334
  %v572 = vpop.f32.mrf.mxu0
  %v573 = vadd.f32 %v92, %v572
  %v574 = vpop.f32.mrf.mxu0
  %v575 = vpop.f32.mrf.mxu0
  %v576 = vadd.f32 %v92, %v575
  %v577 = vpop.f32.mrf.mxu0
  %578 = vmatprep.mubr.bf16.mxu0 0
  %579 = vmatmul.mubr.bf16.gmra.mxu0 %v337
  %v580 = vpop.f32.mrf.mxu0
  %v581 = vadd.f32 %v92, %v580
  %v582 = vpop.f32.mrf.mxu0
  %v583 = vpop.f32.mrf.mxu0
  %v584 = vadd.f32 %v92, %v583
  %v585 = vpop.f32.mrf.mxu0
  %586 = vmatprep.mubr.bf16.mxu0 0
  %587 = vmatmul.mubr.bf16.gmra.mxu0 %v340
  %v588 = vpop.f32.mrf.mxu0
  %v589 = vadd.f32 %v92, %v588
  %v590 = vpop.f32.mrf.mxu0
  %v591 = vpop.f32.mrf.mxu0
  %v592 = vadd.f32 %v92, %v591
  %v593 = vpop.f32.mrf.mxu0
  %594 = vmatprep.mubr.bf16.mxu0 0
  %595 = vmatmul.mubr.bf16.gmra.mxu0 %v343
  %v596 = vpop.f32.mrf.mxu0
  %v597 = vadd.f32 %v92, %v596
  %v598 = vpop.f32.mrf.mxu0
  %v599 = vpop.f32.mrf.mxu0
  %v600 = vadd.f32 %v92, %v599
  %v601 = vpop.f32.mrf.mxu0
  %602 = vmatprep.mubr.bf16.mxu0 0
  %603 = vmatmul.mubr.bf16.gmra.mxu0 %v346
  %v604 = vpop.f32.mrf.mxu0
  %v605 = vadd.f32 %v92, %v604
  %v606 = vpop.f32.mrf.mxu0
  %v607 = vpop.f32.mrf.mxu0
  %v608 = vadd.f32 %v92, %v607
  %v609 = vpop.f32.mrf.mxu0
  %610 = vmatprep.mubr.bf16.mxu0 0
  %611 = vmatmul.mubr.bf16.gmra.mxu0 %v349
  %v612 = vpop.f32.mrf.mxu0
  %v613 = vadd.f32 %v92, %v612
  %v614 = vpop.f32.mrf.mxu0
  %v615 = vpop.f32.mrf.mxu0
  %v616 = vadd.f32 %v92, %v615
  %v617 = vpop.f32.mrf.mxu0
  %618 = vmatprep.mubr.bf16.mxu0 0
  %619 = vmatmul.mubr.bf16.gmra.mxu0 %v352
  %v620 = vpop.f32.mrf.mxu0
  %v621 = vadd.f32 %v92, %v620
  %v622 = vpop.f32.mrf.mxu0
  %v623 = vpop.f32.mrf.mxu0
  %v624 = vadd.f32 %v92, %v623
  %v625 = vpop.f32.mrf.mxu0
  %626 = vmatprep.mubr.bf16.mxu0 0
  %627 = vmatmul.mubr.bf16.gmra.mxu0 %v355
  %v628 = vpop.f32.mrf.mxu0
  %v629 = vadd.f32 %v92, %v628
  %v630 = vpop.f32.mrf.mxu0
  %v631 = vpop.f32.mrf.mxu0
  %v632 = vadd.f32 %v92, %v631
  %v633 = vpop.f32.mrf.mxu0
  %634 = vmatprep.mubr.bf16.mxu0 0
  %635 = vmatmul.mubr.bf16.gmra.mxu0 %v358
  %v636 = vpop.f32.mrf.mxu0
  %v637 = vadd.f32 %v92, %v636
  %v638 = vpop.f32.mrf.mxu0
  %v639 = vpop.f32.mrf.mxu0
  %v640 = vadd.f32 %v92, %v639
  %v641 = vpop.f32.mrf.mxu0
  %642 = vmatprep.mubr.bf16.mxu0 0
  %643 = vmatmul.mubr.bf16.gmra.mxu0 %v361
  %v644 = vpop.f32.mrf.mxu0
  %v645 = vadd.f32 %v92, %v644
  %v646 = vpop.f32.mrf.mxu0
  %v647 = vpop.f32.mrf.mxu0
  %v648 = vadd.f32 %v92, %v647
  %v649 = vpop.f32.mrf.mxu0
  %650 = vmatprep.mubr.bf16.mxu0 0
  %651 = vmatmul.mubr.bf16.gmra.mxu0 %v364
  %v652 = vpop.f32.mrf.mxu0
  %v653 = vadd.f32 %v92, %v652
  %v654 = vpop.f32.mrf.mxu0
  %v655 = vpop.f32.mrf.mxu0
  %v656 = vadd.f32 %v92, %v655
  %v657 = vpop.f32.mrf.mxu0
  %658 = vdwg.mxu0
  %v659 = vmax.f32 %v405, 0.0
  %v660 = vmax.f32 %v408, 0.0
  %v661 = vmax.f32 %v413, 0.0
  %v662 = vmax.f32 %v416, 0.0
  %v663 = vmax.f32 %v421, 0.0
  %v664 = vmax.f32 %v424, 0.0
  %v665 = vmax.f32 %v429, 0.0
  %v666 = vmax.f32 %v432, 0.0
  %v667 = vmax.f32 %v437, 0.0
  %v668 = vmax.f32 %v440, 0.0
  %v669 = vmax.f32 %v445, 0.0
  %v670 = vmax.f32 %v448, 0.0
  %v671 = vmax.f32 %v453, 0.0
  %v672 = vmax.f32 %v456, 0.0
  %v673 = vmax.f32 %v461, 0.0
  %v674 = vmax.f32 %v464, 0.0
  %v675 = vmax.f32 %v469, 0.0
  %v676 = vmax.f32 %v472, 0.0
  %v677 = vmax.f32 %v477, 0.0
  %v678 = vmax.f32 %v480, 0.0
  %v679 = vmax.f32 %v485, 0.0
  %v680 = vmax.f32 %v488, 0.0
  %v681 = vmax.f32 %v493, 0.0
  %v682 = vmax.f32 %v496, 0.0
  %v683 = vmax.f32 %v501, 0.0
  %v684 = vmax.f32 %v504, 0.0
  %v685 = vmax.f32 %v509, 0.0
  %v686 = vmax.f32 %v512, 0.0
  %v687 = vmax.f32 %v517, 0.0
  %v688 = vmax.f32 %v520, 0.0
  %v689 = vmax.f32 %v525, 0.0
  %v690 = vmax.f32 %v528, 0.0
  %v691 = vmax.f32 %v533, 0.0
  %v692 = vmax.f32 %v536, 0.0
  %v693 = vmax.f32 %v541, 0.0
  %v694 = vmax.f32 %v544, 0.0
  %v695 = vmax.f32 %v549, 0.0
  %v696 = vmax.f32 %v552, 0.0
  %v697 = vmax.f32 %v557, 0.0
  %v698 = vmax.f32 %v560, 0.0
  %v699 = vmax.f32 %v565, 0.0
  %v700 = vmax.f32 %v568, 0.0
  %v701 = vmax.f32 %v573, 0.0
  %v702 = vmax.f32 %v576, 0.0
  %v703 = vmax.f32 %v581, 0.0
  %v704 = vmax.f32 %v584, 0.0
  %v705 = vmax.f32 %v589, 0.0
  %v706 = vmax.f32 %v592, 0.0
  %v707 = vmax.f32 %v597, 0.0
  %v708 = vmax.f32 %v600, 0.0
  %v709 = vmax.f32 %v605, 0.0
  %v710 = vmax.f32 %v608, 0.0
  %v711 = vmax.f32 %v613, 0.0
  %v712 = vmax.f32 %v616, 0.0
  %v713 = vmax.f32 %v621, 0.0
  %v714 = vmax.f32 %v624, 0.0
  %v715 = vmax.f32 %v629, 0.0
  %v716 = vmax.f32 %v632, 0.0
  %v717 = vmax.f32 %v637, 0.0
  %v718 = vmax.f32 %v640, 0.0
  %v719 = vmax.f32 %v645, 0.0
  %v720 = vmax.f32 %v648, 0.0
  %v721 = vmax.f32 %v653, 0.0
  %v722 = vmax.f32 %v656, 0.0
  %v723 = vld [vmem:[%s3] sm:$0xff]
  %v725 = vcombine.high %v723, %v723
  %v727 = vunpack.c.l.s4 1983009808
  %v728 = vunpack.c.0.s8 %v727
  %v729 = vlaneseq
  %v730 = vshrl.u32 %v729, 7
  %v731 = vsub.s32 %v728, %v730
  %v732 = vrot.slane %v723, %v731
  %v734 = vunpack.c.l.s4 1983009808
  %v735 = vunpack.c.0.s8 %v734
  %v736 = vlaneseq
  %v737 = vshrl.u32 %v736, 7
  %v738 = vsub.s32 %v735, %v737
  %v739 = vrot.slane %v725, %v738
  %v740 = vcombine.high %v732, %v732
  %v741 = vcombine.high %v739, %v739
  %746 = vmatprep.subr.mxu0 0.0
  %747 = vmatpush1.msra.mxu0 %v674
  %748 = vmatprep.subr.mxu0 0.0
  %749 = vmatpush1.msra.mxu0 %v673
  %750 = vmatprep.subr.mxu0 0.0
  %751 = vmatpush1.msra.mxu0 %v672
  %752 = vmatprep.subr.mxu0 0.0
  %753 = vmatpush1.msra.mxu0 %v671
  %754 = vmatprep.subr.mxu0 0.0
  %755 = vmatpush1.msra.mxu0 %v670
  %756 = vmatprep.subr.mxu0 0.0
  %757 = vmatpush1.msra.mxu0 %v669
  %758 = vmatprep.subr.mxu0 0.0
  %759 = vmatpush1.msra.mxu0 %v668
  %760 = vmatprep.subr.mxu0 0.0
  %761 = vmatpush1.msra.mxu0 %v667
  %762 = vmatprep.subr.mxu0 0.0
  %763 = vmatpush1.msra.mxu0 %v666
  %764 = vmatprep.subr.mxu0 0.0
  %765 = vmatpush1.msra.mxu0 %v665
  %766 = vmatprep.subr.mxu0 0.0
  %767 = vmatpush1.msra.mxu0 %v664
  %768 = vmatprep.subr.mxu0 0.0
  %769 = vmatpush1.msra.mxu0 %v663
  %770 = vmatprep.subr.mxu0 0.0
  %771 = vmatpush1.msra.mxu0 %v662
  %772 = vmatprep.subr.mxu0 0.0
  %773 = vmatpush1.msra.mxu0 %v661
  %774 = vmatprep.subr.mxu0 0.0
  %775 = vmatpush1.msra.mxu0 %v660
  %776 = vmatprep.subr.mxu0 0.0
  %777 = vmatpush1.msra.mxu0 %v659
  %778 = vmatprep.subr.mxu0 0.0
  %779 = vmatpush2.msra.mxu0 %v690
  %780 = vmatprep.subr.mxu0 0.0
  %781 = vmatpush2.msra.mxu0 %v689
  %782 = vmatprep.subr.mxu0 0.0
  %783 = vmatpush2.msra.mxu0 %v688
  %784 = vmatprep.subr.mxu0 0.0
  %785 = vmatpush2.msra.mxu0 %v687
  %786 = vmatprep.subr.mxu0 0.0
  %787 = vmatpush2.msra.mxu0 %v686
  %788 = vmatprep.subr.mxu0 0.0
  %789 = vmatpush2.msra.mxu0 %v685
  %790 = vmatprep.subr.mxu0 0.0
  %791 = vmatpush2.msra.mxu0 %v684
  %792 = vmatprep.subr.mxu0 0.0
  %793 = vmatpush2.msra.mxu0 %v683
  %794 = vmatprep.subr.mxu0 0.0
  %795 = vmatpush2.msra.mxu0 %v682
  %796 = vmatprep.subr.mxu0 0.0
  %797 = vmatpush2.msra.mxu0 %v681
  %798 = vmatprep.subr.mxu0 0.0
  %799 = vmatpush2.msra.mxu0 %v680
  %800 = vmatprep.subr.mxu0 0.0
  %801 = vmatpush2.msra.mxu0 %v679
  %802 = vmatprep.subr.mxu0 0.0
  %803 = vmatpush2.msra.mxu0 %v678
  %804 = vmatprep.subr.mxu0 0.0
  %805 = vmatpush2.msra.mxu0 %v677
  %806 = vmatprep.subr.mxu0 0.0
  %807 = vmatpush2.msra.mxu0 %v676
  %808 = vmatprep.subr.mxu0 0.0
  %809 = vmatpush2.msra.mxu0 %v675
  %810 = vmatprep.mubr.f32.mxu0 %v740
  %811 = vmatmul.mubr.f32.gmra.mxu0 %v732
  %v812 = vpop.f32.mrf.mxu0
  %v813 = vadd.f32 0.0, %v812
  %v814 = vpop.f32.mrf.mxu0
  %815 = vdwg.mxu0
  %816 = vmatprep.subr.mxu0 0.0
  %817 = vmatpush1.msra.mxu0 %v706
  %818 = vmatprep.subr.mxu0 0.0
  %819 = vmatpush1.msra.mxu0 %v705
  %820 = vmatprep.subr.mxu0 0.0
  %821 = vmatpush1.msra.mxu0 %v704
  %822 = vmatprep.subr.mxu0 0.0
  %823 = vmatpush1.msra.mxu0 %v703
  %824 = vmatprep.subr.mxu0 0.0
  %825 = vmatpush1.msra.mxu0 %v702
  %826 = vmatprep.subr.mxu0 0.0
  %827 = vmatpush1.msra.mxu0 %v701
  %828 = vmatprep.subr.mxu0 0.0
  %829 = vmatpush1.msra.mxu0 %v700
  %830 = vmatprep.subr.mxu0 0.0
  %831 = vmatpush1.msra.mxu0 %v699
  %832 = vmatprep.subr.mxu0 0.0
  %833 = vmatpush1.msra.mxu0 %v698
  %834 = vmatprep.subr.mxu0 0.0
  %835 = vmatpush1.msra.mxu0 %v697
  %836 = vmatprep.subr.mxu0 0.0
  %837 = vmatpush1.msra.mxu0 %v696
  %838 = vmatprep.subr.mxu0 0.0
  %839 = vmatpush1.msra.mxu0 %v695
  %840 = vmatprep.subr.mxu0 0.0
  %841 = vmatpush1.msra.mxu0 %v694
  %842 = vmatprep.subr.mxu0 0.0
  %843 = vmatpush1.msra.mxu0 %v693
  %844 = vmatprep.subr.mxu0 0.0
  %845 = vmatpush1.msra.mxu0 %v692
  %846 = vmatprep.subr.mxu0 0.0
  %847 = vmatpush1.msra.mxu0 %v691
  %848 = vmatprep.subr.mxu0 0.0
  %849 = vmatpush2.msra.mxu0 %v722
  %850 = vmatprep.subr.mxu0 0.0
  %851 = vmatpush2.msra.mxu0 %v721
  %852 = vmatprep.subr.mxu0 0.0
  %853 = vmatpush2.msra.mxu0 %v720
  %854 = vmatprep.subr.mxu0 0.0
  %855 = vmatpush2.msra.mxu0 %v719
  %856 = vmatprep.subr.mxu0 0.0
  %857 = vmatpush2.msra.mxu0 %v718
  %858 = vmatprep.subr.mxu0 0.0
  %859 = vmatpush2.msra.mxu0 %v717
  %860 = vmatprep.subr.mxu0 0.0
  %861 = vmatpush2.msra.mxu0 %v716
  %862 = vmatprep.subr.mxu0 0.0
  %863 = vmatpush2.msra.mxu0 %v715
  %864 = vmatprep.subr.mxu0 0.0
  %865 = vmatpush2.msra.mxu0 %v714
  %866 = vmatprep.subr.mxu0 0.0
  %867 = vmatpush2.msra.mxu0 %v713
  %868 = vmatprep.subr.mxu0 0.0
  %869 = vmatpush2.msra.mxu0 %v712
  %870 = vmatprep.subr.mxu0 0.0
  %871 = vmatpush2.msra.mxu0 %v711
  %872 = vmatprep.subr.mxu0 0.0
  %873 = vmatpush2.msra.mxu0 %v710
  %874 = vmatprep.subr.mxu0 0.0
  %875 = vmatpush2.msra.mxu0 %v709
  %876 = vmatprep.subr.mxu0 0.0
  %877 = vmatpush2.msra.mxu0 %v708
  %878 = vmatprep.subr.mxu0 0.0
  %879 = vmatpush2.msra.mxu0 %v707
  %880 = vmatprep.mubr.f32.mxu0 %v741
  %881 = vmatmul.mubr.f32.gmra.mxu0 %v739
  %v882 = vpop.f32.mrf.mxu0
  %v883 = vadd.f32 %v813, %v882
  %v884 = vpop.f32.mrf.mxu0
  %885 = vdwg.mxu0
  %886 = vst [vmem:[%s4] sm:$0x3] %v883
  // Predicated region
  $region18: #{simclr_forward.2} parent=0 // pred_check
    _
  $region19: #{simclr_forward.2} parent=0 // pred_check_branch
    %888 = sbr.rel (0) target = $region21
  $region20: #{simclr_forward.2} parent=0 // pred_region
    _
  $region21: #{simclr_forward.2} parent=0 // pred_fallthru
    _
  // Predicated region
  $region22: #{simclr_forward.2} parent=0 // pred_check
    _
  $region23: #{simclr_forward.2} parent=0 // pred_check_branch
    %890 = sbr.rel (0) target = $region25
  $region24: #{simclr_forward.2} parent=0 // pred_region
    _
  $region25: #{simclr_forward.2} parent=0 // pred_fallthru
    _

</llo_original>
